<compile_context>
chip_gen: v6e
topology: v6e:2x2x1
jax: 0.10.0
libtpu: 0.0.40
codegen_flags: <defaults>
</compile_context>

<pallas_src>
import functools

import jax
import jax.numpy as jnp
import numpy as np
from jax.experimental import pallas as pl
from jax.experimental.pallas import tpu as pltpu


def _softmax_recip(d):
    """Approx EUP reciprocal (perf-review item) + one Newton step.

    The refinement runs on the tiny (.,1)/(1,.) denominator tile, so it is
    ~free but keeps f32-level accuracy for the correctness check.
    """
    r = pl.reciprocal(d, approx=True)
    return r * (2.0 - d * r)


def _scores_t(k, q, wk, wqt, bsum, wv_ref, tanh_dtype):
    """Transposed additive-attention scores for one batch row.

    k   : (Pk, K)   q    : (Pq, Q)
    wk  : (H, K)    wqt  : (Q, H)   bsum : (1, H) == bk + bq (fused)
    wv_ref : SMEM ref, shape (H,)
    Returns scores_T (Pq, Pk) f32 with scores_T[pq, pk] == scores[pk, pq].
    (w_v bias dropped: softmax shift-invariance.)
    """
    # Projections: two small MXU matmuls.  out1 lands as (H, Pk) so per-h rows
    # are cheap sublane slices; out2 lands as (Pq, H) in natural orientation.
    out1t = jax.lax.dot_general(wk, k, (((1,), (1,)), ((), ())),
                                preferred_element_type=jnp.float32)        # (H, Pk)
    out2 = jnp.dot(q, wqt, preferred_element_type=jnp.float32) + bsum      # (Pq, H)

    H, Pk = out1t.shape
    Pq = out2.shape[0]

    # Accumulate over H keeping only a (Pq, Pk) tile live: tanh on the EUP,
    # scalar MAC on the VPU (w_v scalar from SMEM).
    scores_t = jnp.zeros((Pq, Pk), jnp.float32)
    # H is a small compile-time constant; static unroll is fine at H <= ~16.
    # TODO(synk): at larger H, switch to lax.fori_loop(..., unroll=4..8) and
    # process h in sublane chunks of 8 (one XLU transpose per chunk) to bound
    # vreg pressure and per-h lane-select cost; verify with a bundle dump.
    for h in range(H):
        a = out2[:, h:h + 1]            # (Pq, 1) -> lane broadcast
        b = out1t[h:h + 1, :]           # (1, Pk) -> sublane broadcast (cheap)
        z = a + b
        if np.dtype(tanh_dtype) != np.dtype(jnp.float32):
            # bf16 tanh runs ~2x faster on the v6e/v7x EUP; do NOT use on v5e.
            z = z.astype(tanh_dtype)
        scores_t = scores_t + wv_ref[h] * jnp.tanh(z).astype(jnp.float32)
    return scores_t


def _addatt_kernel(key_ref, que_ref, valt_ref,
                   wk_ref, wqt_ref, bsum_ref, wv_ref,
                   out_ref, *, tanh_dtype):
    bblk = key_ref.shape[0]          # 1 (grid over B) or B (collapsed batch)
    for b in range(bblk):
        st = _scores_t(key_ref[b], que_ref[b],
                       wk_ref[...], wqt_ref[...], bsum_ref[...],
                       wv_ref, tanh_dtype)
        # valid_lens is None -> softmax over dim=1 (key axis, Pk) == axis 1
        # (lanes) of the transposed scores.
        m = jnp.max(st, axis=1, keepdims=True)
        e = jnp.exp(st - m)
        attn_t = e * _softmax_recip(jnp.sum(e, axis=1, keepdims=True))     # (Pq, Pk)
        # Lane-dense output: (V, Pq) @ (Pq, Pk) -> (V, Pk), Pk on lanes.
        out_t = jnp.dot(valt_ref[b], attn_t, preferred_element_type=jnp.float32)
        out_ref[b] = out_t.astype(out_ref.dtype)


def _addatt_masked_kernel(key_ref, que_ref, valt_ref, vl_ref,
                          wk_ref, wqt_ref, bsum_ref, wv_ref,
                          out_ref, *, tanh_dtype):
    bblk = key_ref.shape[0]
    Pk = key_ref.shape[1]
    Pq = que_ref.shape[1]
    for b in range(bblk):
        st = _scores_t(key_ref[b], que_ref[b],
                       wk_ref[...], wqt_ref[...], bsum_ref[...],
                       wv_ref, tanh_dtype)
        # mask_T[pq, pk] = pq < valid_len[pk]; valid lengths arrive lane-dense
        # as a (1, Pk) int32 row, so only a sublane iota + compare is needed.
        row = jax.lax.broadcasted_iota(jnp.int32, (Pq, Pk), 0)
        masked = jnp.where(row < vl_ref[b], st, jnp.float32(-1000000.0))
        # masked softmax over the query axis (Pq) == axis 0 of scores_T.
        m = jnp.max(masked, axis=0, keepdims=True)
        e = jnp.exp(masked - m)
        attn_t = e * _softmax_recip(jnp.sum(e, axis=0, keepdims=True))     # (Pq, Pk)
        out_t = jnp.dot(valt_ref[b], attn_t, preferred_element_type=jnp.float32)
        out_ref[b] = out_t.astype(out_ref.dtype)


def _tensorcores_per_chip() -> int:
    """Best-effort TC-per-chip detection (perf heuristic only, never affects
    correctness): v7x and v4/v5p megacore chips expose 2 TensorCores."""
    try:
        kind = jax.devices()[0].device_kind.lower()
    except Exception:
        return 1
    return 2 if any(t in kind for t in ("v7", "v4", "v5p", "v5 p")) else 1


def init_addatt_params(rng, keysize, numhidden, quesize):
    """Deterministic nn.Linear-style init (uniform +/- 1/sqrt(fan_in))."""
    kWk, kbk, kWq, kbq, kwv, kbv = jax.random.split(rng, 6)

    def lin(kw, kb, fan_in, fan_out):
        bound = 1.0 / np.sqrt(fan_in)
        w = jax.random.uniform(kw, (fan_out, fan_in), jnp.float32, -bound, bound)
        b = jax.random.uniform(kb, (fan_out,), jnp.float32, -bound, bound)
        return w, b

    Wk, bk = lin(kWk, kbk, keysize, numhidden)    # (H, K), (H,)
    Wq, bq = lin(kWq, kbq, quesize, numhidden)    # (H, Q), (H,)
    wv, bv = lin(kwv, kbv, numhidden, 1)          # (1, H), (1,)
    return dict(Wk=Wk, bk=bk, Wq=Wq, bq=bq, wv=wv, bv=bv)


def add_att_forward(params, key, que, value, valid_lens=None, *,
                    tanh_dtype=jnp.float32):
    """Pallas forward for AddAtt.  `tanh_dtype=jnp.bfloat16` enables the
    faster EUP path on v6e/v7x at ~1e-3 accuracy (keep f32 on v5e)."""
    B, Pk, K = key.shape
    _, Pq, Q = que.shape
    _, Pv, V = value.shape
    H = params["Wk"].shape[0]

    # Parameter / input plumbing (layout only, no compute hoisted):
    wk = params["Wk"]                                   # (H, K)  contracted over K
    wqt = params["Wq"].T                                # (Q, H)
    bsum = (params["bk"] + params["bq"]).reshape(1, H)  # fused bk + bq row
    wv = params["wv"].reshape(H)                        # (H,) SMEM scalars; bv dropped
    value_t = jnp.swapaxes(value, 1, 2)                 # (B, V, Pq) lane-dense Pq

    # Grid strategy: one grid step per batch row only if the chip has >1 TC to
    # shard onto; otherwise fold B into the block (per-step overhead paid once).
    if B > 1 and _tensorcores_per_chip() > 1:
        steps, bblk = B, 1
    else:
        steps, bblk = 1, B
    # TODO(synk): at B == 1 on v7x add a second "parallel" grid axis tiling the
    # non-softmax dim (Pq unmasked / Pk masked) so both TCs get work; the same
    # tiling bounds the live (Pq, Pk) f32 tile at large Pk/Pq (VMEM guardrail).

    def batch_spec(d1, d2):
        return pl.BlockSpec((bblk, d1, d2), lambda i: (i, 0, 0))

    def full(shape):
        return pl.BlockSpec(shape, lambda i: (0,) * len(shape))

    data_specs = [batch_spec(Pk, K), batch_spec(Pq, Q), batch_spec(V, Pq)]
    weight_specs = [
        full(wk.shape), full(wqt.shape), full(bsum.shape),
        pl.BlockSpec(memory_space=pltpu.MemorySpace.SMEM),   # w_v -> SMEM scalars
    ]
    out_spec = pl.BlockSpec((bblk, V, Pk), lambda i: (i, 0, 0))
    out_shape = jax.ShapeDtypeStruct((B, V, Pk), jnp.float32)  # transposed, Pk on lanes
    cparams = pltpu.CompilerParams(
        dimension_semantics=("parallel",),
        vmem_limit_bytes=32 * 1024 * 1024,   # explicit; plenty at these tiles
    )

    if valid_lens is None:
        kernel = functools.partial(_addatt_kernel, tanh_dtype=tanh_dtype)
        res = pl.pallas_call(
            kernel,
            grid=(steps,),
            in_specs=data_specs + weight_specs,
            out_specs=out_spec,
            out_shape=out_shape,
            compiler_params=cparams,
        )(key, que, value_t, wk, wqt, bsum, wv)
    else:
        # valid_lens: (B, Pk) ints masking the last (query) axis — matches the
        # reference masked_softmax reshape/repeat_interleave semantics.
        vl = jnp.asarray(valid_lens, dtype=jnp.int32).reshape(B, 1, Pk)  # lane-dense
        vl_spec = pl.BlockSpec((bblk, 1, Pk), lambda i: (i, 0, 0))
        kernel = functools.partial(_addatt_masked_kernel, tanh_dtype=tanh_dtype)
        res = pl.pallas_call(
            kernel,
            grid=(steps,),
            in_specs=data_specs + [vl_spec] + weight_specs,
            out_specs=out_spec,
            out_shape=out_shape,
            compiler_params=cparams,
        )(key, que, value_t, vl, wk, wqt, bsum, wv)

    return jnp.swapaxes(res, 1, 2)   # (B, V, Pk) -> (B, Pk, V)


def add_att_reference(params, key, que, value, valid_lens=None):
    """Pure-JAX reference mirroring the PyTorch forward (bv included)."""
    out1 = key @ params["Wk"].T + params["bk"]          # (B, Pk, H)
    out2 = que @ params["Wq"].T + params["bq"]          # (B, Pq, H)
    feats = jnp.tanh(out1[:, :, None, :] + out2[:, None, :, :])
    scores = jnp.squeeze(feats @ params["wv"].T, -1) + params["bv"][0]
    if valid_lens is None:
        attn = jax.nn.softmax(scores, axis=1)
    else:
        B, Pk, Pq = scores.shape
        vl = jnp.asarray(valid_lens, dtype=jnp.int32).reshape(B, Pk)
        mask = jnp.arange(Pq)[None, None, :] < vl[:, :, None]
        attn = jax.nn.softmax(jnp.where(mask, scores, -1000000.0), axis=-1)
    return attn @ value


if __name__ == "__main__":
    B, PAIR = 2, 10
    KEYSIZE, QUESIZE, VALUESIZE, NUMHIDDEN = 20, 15, 8, 12

    root = jax.random.PRNGKey(0)
    kp, kk, kq, kv = jax.random.split(root, 4)
    params = init_addatt_params(kp, KEYSIZE, NUMHIDDEN, QUESIZE)

    key = jax.random.normal(kk, (B, PAIR, KEYSIZE), jnp.float32)
    que = jax.random.normal(kq, (B, PAIR, QUESIZE), jnp.float32)
    value = jax.random.normal(kv, (B, PAIR, VALUESIZE), jnp.float32)

    # Tolerance note: the softmax epilogue uses the EUP approx reciprocal
    # (+1 Newton step); everything else is f32.  1e-4 leaves ample margin while
    # still catching layout/indexing bugs (those produce O(1) errors).
    TOL = 1e-4

    # Default path: valid_lens=None -> softmax over dim=1 (key axis).
    out = jax.block_until_ready(add_att_forward(params, key, que, value))
    ref = add_att_reference(params, key, que, value)
    np.testing.assert_allclose(np.asarray(out), np.asarray(ref), rtol=TOL, atol=TOL)

    # Masked path: per-(batch, key-row) valid lengths over the query axis.
    valid_lens = jnp.tile(jnp.arange(1, PAIR + 1, dtype=jnp.int32)[None, :], (B, 1))
    out_m = jax.block_until_ready(add_att_forward(params, key, que, value, valid_lens))
    ref_m = add_att_reference(params, key, que, value, valid_lens)
    np.testing.assert_allclose(np.asarray(out_m), np.asarray(ref_m), rtol=TOL, atol=TOL)

    print("KERNEL_OK")
</pallas_src>

<mosaic_0001>
module attributes {stable_mosaic.version = 11 : i64} {
  func.func @_addatt_kernel(%arg0: i32, %arg1: memref<2x10x20xf32, #tpu.memory_space<vmem>>, %arg2: memref<2x10x15xf32, #tpu.memory_space<vmem>>, %arg3: memref<2x8x10xf32, #tpu.memory_space<vmem>>, %arg4: memref<12x20xf32, #tpu.memory_space<vmem>>, %arg5: memref<15x12xf32, #tpu.memory_space<vmem>>, %arg6: memref<1x12xf32, #tpu.memory_space<vmem>>, %arg7: memref<12xf32, #tpu.memory_space<smem>>, %arg8: memref<2x8x10xf32, #tpu.memory_space<vmem>>) attributes {dimension_semantics = [#tpu.dimension_semantics<parallel>], iteration_bounds = array<i64: 1>, scalar_prefetch = 0 : i64, scratch_operands = 0 : i64, tpu.core_type = #tpu.core_type<tc>, window_params = [{transform_indices = @transform_0, window_bounds = array<i64: 2, 10, 20>}, {transform_indices = @transform_1, window_bounds = array<i64: 2, 10, 15>}, {transform_indices = @transform_2, window_bounds = array<i64: 2, 8, 10>}, {pipeline_mode = #tpu.pipeline_mode<synchronous>, transform_indices = @transform_3, window_bounds = array<i64: 12, 20>}, {pipeline_mode = #tpu.pipeline_mode<synchronous>, transform_indices = @transform_4, window_bounds = array<i64: 15, 12>}, {pipeline_mode = #tpu.pipeline_mode<synchronous>, transform_indices = @transform_5, window_bounds = array<i64: 1, 12>}, {transform_indices = @transform_6, window_bounds = array<i64: 12>}, {transform_indices = @transform_7, window_bounds = array<i64: 2, 8, 10>}]} {
    %c0 = arith.constant 0 : index
    %c0_0 = arith.constant 0 : index
    %c0_1 = arith.constant 0 : index
    %0 = vector.load %arg1[%c0, %c0_0, %c0_1] : memref<2x10x20xf32, #tpu.memory_space<vmem>>, vector<1x10x20xf32>
    %1 = vector.shape_cast %0 : vector<1x10x20xf32> to vector<10x20xf32>
    %c0_2 = arith.constant 0 : index
    %c0_3 = arith.constant 0 : index
    %c0_4 = arith.constant 0 : index
    %2 = vector.load %arg2[%c0_2, %c0_3, %c0_4] : memref<2x10x15xf32, #tpu.memory_space<vmem>>, vector<1x10x15xf32>
    %3 = vector.shape_cast %2 : vector<1x10x15xf32> to vector<10x15xf32>
    %c0_5 = arith.constant 0 : index
    %c0_6 = arith.constant 0 : index
    %4 = vector.load %arg4[%c0_5, %c0_6] : memref<12x20xf32, #tpu.memory_space<vmem>>, vector<12x20xf32>
    %c0_7 = arith.constant 0 : index
    %c0_8 = arith.constant 0 : index
    %5 = vector.load %arg5[%c0_7, %c0_8] : memref<15x12xf32, #tpu.memory_space<vmem>>, vector<15x12xf32>
    %c0_9 = arith.constant 0 : index
    %c0_10 = arith.constant 0 : index
    %6 = vector.load %arg6[%c0_9, %c0_10] : memref<1x12xf32, #tpu.memory_space<vmem>>, vector<1x12xf32>
    %cst = arith.constant dense<0.000000e+00> : vector<12x10xf32>
    %7 = tpu.matmul %4, %1, %cst {dimension_numbers = #tpu.dot_dimension_numbers<[1], [1], [0], [0], [0, 0, 1, 0], [], []>} : vector<12x20xf32>, vector<10x20xf32>, vector<12x10xf32> -> vector<12x10xf32>
    %cst_11 = arith.constant dense<0.000000e+00> : vector<10x12xf32>
    %8 = tpu.matmul %3, %5, %cst_11 {dimension_numbers = #tpu.dot_dimension_numbers<[1], [0], [0], [1], [0, 0, 1, 1], [], []>} : vector<10x15xf32>, vector<15x12xf32>, vector<10x12xf32> -> vector<10x12xf32>
    %9 = vector.broadcast %6 : vector<1x12xf32> to vector<10x12xf32>
    %10 = arith.addf %8, %9 : vector<10x12xf32>
    %cst_12 = arith.constant 0.000000e+00 : f32
    %11 = vector.broadcast %cst_12 : f32 to vector<10x10xf32>
    %12 = vector.extract_strided_slice %10 {offsets = [0, 0], sizes = [10, 1], strides = [1, 1]} : vector<10x12xf32> to vector<10x1xf32>
    %13 = vector.extract_strided_slice %7 {offsets = [0, 0], sizes = [1, 10], strides = [1, 1]} : vector<12x10xf32> to vector<1x10xf32>
    %14 = vector.broadcast %12 : vector<10x1xf32> to vector<10x10xf32>
    %15 = vector.broadcast %13 : vector<1x10xf32> to vector<10x10xf32>
    %16 = arith.addf %14, %15 : vector<10x10xf32>
    %c0_13 = arith.constant 0 : index
    %17 = memref.load %arg7[%c0_13] : memref<12xf32, #tpu.memory_space<smem>>
    %18 = math.tanh %16 : vector<10x10xf32>
    %19 = vector.broadcast %17 : f32 to vector<10x10xf32>
    %20 = arith.mulf %19, %18 : vector<10x10xf32>
    %21 = arith.addf %11, %20 : vector<10x10xf32>
    %22 = vector.extract_strided_slice %10 {offsets = [0, 1], sizes = [10, 1], strides = [1, 1]} : vector<10x12xf32> to vector<10x1xf32>
    %23 = vector.extract_strided_slice %7 {offsets = [1, 0], sizes = [1, 10], strides = [1, 1]} : vector<12x10xf32> to vector<1x10xf32>
    %24 = vector.broadcast %22 : vector<10x1xf32> to vector<10x10xf32>
    %25 = vector.broadcast %23 : vector<1x10xf32> to vector<10x10xf32>
    %26 = arith.addf %24, %25 : vector<10x10xf32>
    %c1 = arith.constant 1 : index
    %27 = memref.load %arg7[%c1] : memref<12xf32, #tpu.memory_space<smem>>
    %28 = math.tanh %26 : vector<10x10xf32>
    %29 = vector.broadcast %27 : f32 to vector<10x10xf32>
    %30 = arith.mulf %29, %28 : vector<10x10xf32>
    %31 = arith.addf %21, %30 : vector<10x10xf32>
    %32 = vector.extract_strided_slice %10 {offsets = [0, 2], sizes = [10, 1], strides = [1, 1]} : vector<10x12xf32> to vector<10x1xf32>
    %33 = vector.extract_strided_slice %7 {offsets = [2, 0], sizes = [1, 10], strides = [1, 1]} : vector<12x10xf32> to vector<1x10xf32>
    %34 = vector.broadcast %32 : vector<10x1xf32> to vector<10x10xf32>
    %35 = vector.broadcast %33 : vector<1x10xf32> to vector<10x10xf32>
    %36 = arith.addf %34, %35 : vector<10x10xf32>
    %c2 = arith.constant 2 : index
    %37 = memref.load %arg7[%c2] : memref<12xf32, #tpu.memory_space<smem>>
    %38 = math.tanh %36 : vector<10x10xf32>
    %39 = vector.broadcast %37 : f32 to vector<10x10xf32>
    %40 = arith.mulf %39, %38 : vector<10x10xf32>
    %41 = arith.addf %31, %40 : vector<10x10xf32>
    %42 = vector.extract_strided_slice %10 {offsets = [0, 3], sizes = [10, 1], strides = [1, 1]} : vector<10x12xf32> to vector<10x1xf32>
    %43 = vector.extract_strided_slice %7 {offsets = [3, 0], sizes = [1, 10], strides = [1, 1]} : vector<12x10xf32> to vector<1x10xf32>
    %44 = vector.broadcast %42 : vector<10x1xf32> to vector<10x10xf32>
    %45 = vector.broadcast %43 : vector<1x10xf32> to vector<10x10xf32>
    %46 = arith.addf %44, %45 : vector<10x10xf32>
    %c3 = arith.constant 3 : index
    %47 = memref.load %arg7[%c3] : memref<12xf32, #tpu.memory_space<smem>>
    %48 = math.tanh %46 : vector<10x10xf32>
    %49 = vector.broadcast %47 : f32 to vector<10x10xf32>
    %50 = arith.mulf %49, %48 : vector<10x10xf32>
    %51 = arith.addf %41, %50 : vector<10x10xf32>
    %52 = vector.extract_strided_slice %10 {offsets = [0, 4], sizes = [10, 1], strides = [1, 1]} : vector<10x12xf32> to vector<10x1xf32>
    %53 = vector.extract_strided_slice %7 {offsets = [4, 0], sizes = [1, 10], strides = [1, 1]} : vector<12x10xf32> to vector<1x10xf32>
    %54 = vector.broadcast %52 : vector<10x1xf32> to vector<10x10xf32>
    %55 = vector.broadcast %53 : vector<1x10xf32> to vector<10x10xf32>
    %56 = arith.addf %54, %55 : vector<10x10xf32>
    %c4 = arith.constant 4 : index
    %57 = memref.load %arg7[%c4] : memref<12xf32, #tpu.memory_space<smem>>
    %58 = math.tanh %56 : vector<10x10xf32>
    %59 = vector.broadcast %57 : f32 to vector<10x10xf32>
    %60 = arith.mulf %59, %58 : vector<10x10xf32>
    %61 = arith.addf %51, %60 : vector<10x10xf32>
    %62 = vector.extract_strided_slice %10 {offsets = [0, 5], sizes = [10, 1], strides = [1, 1]} : vector<10x12xf32> to vector<10x1xf32>
    %63 = vector.extract_strided_slice %7 {offsets = [5, 0], sizes = [1, 10], strides = [1, 1]} : vector<12x10xf32> to vector<1x10xf32>
    %64 = vector.broadcast %62 : vector<10x1xf32> to vector<10x10xf32>
    %65 = vector.broadcast %63 : vector<1x10xf32> to vector<10x10xf32>
    %66 = arith.addf %64, %65 : vector<10x10xf32>
    %c5 = arith.constant 5 : index
    %67 = memref.load %arg7[%c5] : memref<12xf32, #tpu.memory_space<smem>>
    %68 = math.tanh %66 : vector<10x10xf32>
    %69 = vector.broadcast %67 : f32 to vector<10x10xf32>
    %70 = arith.mulf %69, %68 : vector<10x10xf32>
    %71 = arith.addf %61, %70 : vector<10x10xf32>
    %72 = vector.extract_strided_slice %10 {offsets = [0, 6], sizes = [10, 1], strides = [1, 1]} : vector<10x12xf32> to vector<10x1xf32>
    %73 = vector.extract_strided_slice %7 {offsets = [6, 0], sizes = [1, 10], strides = [1, 1]} : vector<12x10xf32> to vector<1x10xf32>
    %74 = vector.broadcast %72 : vector<10x1xf32> to vector<10x10xf32>
    %75 = vector.broadcast %73 : vector<1x10xf32> to vector<10x10xf32>
    %76 = arith.addf %74, %75 : vector<10x10xf32>
    %c6 = arith.constant 6 : index
    %77 = memref.load %arg7[%c6] : memref<12xf32, #tpu.memory_space<smem>>
    %78 = math.tanh %76 : vector<10x10xf32>
    %79 = vector.broadcast %77 : f32 to vector<10x10xf32>
    %80 = arith.mulf %79, %78 : vector<10x10xf32>
    %81 = arith.addf %71, %80 : vector<10x10xf32>
    %82 = vector.extract_strided_slice %10 {offsets = [0, 7], sizes = [10, 1], strides = [1, 1]} : vector<10x12xf32> to vector<10x1xf32>
    %83 = vector.extract_strided_slice %7 {offsets = [7, 0], sizes = [1, 10], strides = [1, 1]} : vector<12x10xf32> to vector<1x10xf32>
    %84 = vector.broadcast %82 : vector<10x1xf32> to vector<10x10xf32>
    %85 = vector.broadcast %83 : vector<1x10xf32> to vector<10x10xf32>
    %86 = arith.addf %84, %85 : vector<10x10xf32>
    %c7 = arith.constant 7 : index
    %87 = memref.load %arg7[%c7] : memref<12xf32, #tpu.memory_space<smem>>
    %88 = math.tanh %86 : vector<10x10xf32>
    %89 = vector.broadcast %87 : f32 to vector<10x10xf32>
    %90 = arith.mulf %89, %88 : vector<10x10xf32>
    %91 = arith.addf %81, %90 : vector<10x10xf32>
    %92 = vector.extract_strided_slice %10 {offsets = [0, 8], sizes = [10, 1], strides = [1, 1]} : vector<10x12xf32> to vector<10x1xf32>
    %93 = vector.extract_strided_slice %7 {offsets = [8, 0], sizes = [1, 10], strides = [1, 1]} : vector<12x10xf32> to vector<1x10xf32>
    %94 = vector.broadcast %92 : vector<10x1xf32> to vector<10x10xf32>
    %95 = vector.broadcast %93 : vector<1x10xf32> to vector<10x10xf32>
    %96 = arith.addf %94, %95 : vector<10x10xf32>
    %c8 = arith.constant 8 : index
    %97 = memref.load %arg7[%c8] : memref<12xf32, #tpu.memory_space<smem>>
    %98 = math.tanh %96 : vector<10x10xf32>
    %99 = vector.broadcast %97 : f32 to vector<10x10xf32>
    %100 = arith.mulf %99, %98 : vector<10x10xf32>
    %101 = arith.addf %91, %100 : vector<10x10xf32>
    %102 = vector.extract_strided_slice %10 {offsets = [0, 9], sizes = [10, 1], strides = [1, 1]} : vector<10x12xf32> to vector<10x1xf32>
    %103 = vector.extract_strided_slice %7 {offsets = [9, 0], sizes = [1, 10], strides = [1, 1]} : vector<12x10xf32> to vector<1x10xf32>
    %104 = vector.broadcast %102 : vector<10x1xf32> to vector<10x10xf32>
    %105 = vector.broadcast %103 : vector<1x10xf32> to vector<10x10xf32>
    %106 = arith.addf %104, %105 : vector<10x10xf32>
    %c9 = arith.constant 9 : index
    %107 = memref.load %arg7[%c9] : memref<12xf32, #tpu.memory_space<smem>>
    %108 = math.tanh %106 : vector<10x10xf32>
    %109 = vector.broadcast %107 : f32 to vector<10x10xf32>
    %110 = arith.mulf %109, %108 : vector<10x10xf32>
    %111 = arith.addf %101, %110 : vector<10x10xf32>
    %112 = vector.extract_strided_slice %10 {offsets = [0, 10], sizes = [10, 1], strides = [1, 1]} : vector<10x12xf32> to vector<10x1xf32>
    %113 = vector.extract_strided_slice %7 {offsets = [10, 0], sizes = [1, 10], strides = [1, 1]} : vector<12x10xf32> to vector<1x10xf32>
    %114 = vector.broadcast %112 : vector<10x1xf32> to vector<10x10xf32>
    %115 = vector.broadcast %113 : vector<1x10xf32> to vector<10x10xf32>
    %116 = arith.addf %114, %115 : vector<10x10xf32>
    %c10 = arith.constant 10 : index
    %117 = memref.load %arg7[%c10] : memref<12xf32, #tpu.memory_space<smem>>
    %118 = math.tanh %116 : vector<10x10xf32>
    %119 = vector.broadcast %117 : f32 to vector<10x10xf32>
    %120 = arith.mulf %119, %118 : vector<10x10xf32>
    %121 = arith.addf %111, %120 : vector<10x10xf32>
    %122 = vector.extract_strided_slice %10 {offsets = [0, 11], sizes = [10, 1], strides = [1, 1]} : vector<10x12xf32> to vector<10x1xf32>
    %123 = vector.extract_strided_slice %7 {offsets = [11, 0], sizes = [1, 10], strides = [1, 1]} : vector<12x10xf32> to vector<1x10xf32>
    %124 = vector.broadcast %122 : vector<10x1xf32> to vector<10x10xf32>
    %125 = vector.broadcast %123 : vector<1x10xf32> to vector<10x10xf32>
    %126 = arith.addf %124, %125 : vector<10x10xf32>
    %c11 = arith.constant 11 : index
    %127 = memref.load %arg7[%c11] : memref<12xf32, #tpu.memory_space<smem>>
    %128 = math.tanh %126 : vector<10x10xf32>
    %129 = vector.broadcast %127 : f32 to vector<10x10xf32>
    %130 = arith.mulf %129, %128 : vector<10x10xf32>
    %131 = arith.addf %121, %130 : vector<10x10xf32>
    %cst_14 = arith.constant dense<0xFF800000> : vector<10xf32>
    %132 = vector.multi_reduction <maximumf>, %131, %cst_14 [1] : vector<10x10xf32> to vector<10xf32>
    %133 = vector.shape_cast %132 : vector<10xf32> to vector<10x1xf32>
    %134 = vector.broadcast %133 : vector<10x1xf32> to vector<10x10xf32>
    %135 = arith.subf %131, %134 : vector<10x10xf32>
    %136 = math.exp %135 : vector<10x10xf32>
    %cst_15 = arith.constant dense<0.000000e+00> : vector<10xf32>
    %137 = vector.multi_reduction <add>, %136, %cst_15 [1] : vector<10x10xf32> to vector<10xf32>
    %138 = vector.shape_cast %137 : vector<10xf32> to vector<10x1xf32>
    %139 = tpu.reciprocal %138 {approx = true} : vector<10x1xf32> -> vector<10x1xf32>
    %140 = arith.mulf %138, %139 : vector<10x1xf32>
    %cst_16 = arith.constant 2.000000e+00 : f32
    %141 = vector.broadcast %cst_16 : f32 to vector<10x1xf32>
    %142 = arith.subf %141, %140 : vector<10x1xf32>
    %143 = arith.mulf %139, %142 : vector<10x1xf32>
    %144 = vector.broadcast %143 : vector<10x1xf32> to vector<10x10xf32>
    %145 = arith.mulf %136, %144 : vector<10x10xf32>
    %c0_17 = arith.constant 0 : index
    %c0_18 = arith.constant 0 : index
    %c0_19 = arith.constant 0 : index
    %146 = vector.load %arg3[%c0_17, %c0_18, %c0_19] : memref<2x8x10xf32, #tpu.memory_space<vmem>>, vector<1x8x10xf32>
    %147 = vector.shape_cast %146 : vector<1x8x10xf32> to vector<8x10xf32>
    %cst_20 = arith.constant dense<0.000000e+00> : vector<8x10xf32>
    %148 = tpu.matmul %147, %145, %cst_20 {dimension_numbers = #tpu.dot_dimension_numbers<[1], [0], [0], [1], [0, 0, 1, 1], [], []>} : vector<8x10xf32>, vector<10x10xf32>, vector<8x10xf32> -> vector<8x10xf32>
    %c0_21 = arith.constant 0 : index
    %c0_22 = arith.constant 0 : index
    %c0_23 = arith.constant 0 : index
    %149 = vector.load %arg8[%c0_21, %c0_22, %c0_23] : memref<2x8x10xf32, #tpu.memory_space<vmem>>, vector<1x8x10xf32>
    %150 = vector.shape_cast %149 : vector<1x8x10xf32> to vector<8x10xf32>
    %151 = vector.shape_cast %148 : vector<8x10xf32> to vector<1x8x10xf32>
    tpu.vector_store %arg8[%c0_21, %c0_22, %c0_23], %151 {strides = array<i32>} : memref<2x8x10xf32, #tpu.memory_space<vmem>>, vector<1x8x10xf32>,
    %c1_24 = arith.constant 1 : index
    %c0_25 = arith.constant 0 : index
    %c0_26 = arith.constant 0 : index
    %152 = vector.load %arg1[%c1_24, %c0_25, %c0_26] : memref<2x10x20xf32, #tpu.memory_space<vmem>>, vector<1x10x20xf32>
    %153 = vector.shape_cast %152 : vector<1x10x20xf32> to vector<10x20xf32>
    %c1_27 = arith.constant 1 : index
    %c0_28 = arith.constant 0 : index
    %c0_29 = arith.constant 0 : index
    %154 = vector.load %arg2[%c1_27, %c0_28, %c0_29] : memref<2x10x15xf32, #tpu.memory_space<vmem>>, vector<1x10x15xf32>
    %155 = vector.shape_cast %154 : vector<1x10x15xf32> to vector<10x15xf32>
    %c0_30 = arith.constant 0 : index
    %c0_31 = arith.constant 0 : index
    %156 = vector.load %arg4[%c0_30, %c0_31] : memref<12x20xf32, #tpu.memory_space<vmem>>, vector<12x20xf32>
    %c0_32 = arith.constant 0 : index
    %c0_33 = arith.constant 0 : index
    %157 = vector.load %arg5[%c0_32, %c0_33] : memref<15x12xf32, #tpu.memory_space<vmem>>, vector<15x12xf32>
    %c0_34 = arith.constant 0 : index
    %c0_35 = arith.constant 0 : index
    %158 = vector.load %arg6[%c0_34, %c0_35] : memref<1x12xf32, #tpu.memory_space<vmem>>, vector<1x12xf32>
    %cst_36 = arith.constant dense<0.000000e+00> : vector<12x10xf32>
    %159 = tpu.matmul %156, %153, %cst_36 {dimension_numbers = #tpu.dot_dimension_numbers<[1], [1], [0], [0], [0, 0, 1, 0], [], []>} : vector<12x20xf32>, vector<10x20xf32>, vector<12x10xf32> -> vector<12x10xf32>
    %cst_37 = arith.constant dense<0.000000e+00> : vector<10x12xf32>
    %160 = tpu.matmul %155, %157, %cst_37 {dimension_numbers = #tpu.dot_dimension_numbers<[1], [0], [0], [1], [0, 0, 1, 1], [], []>} : vector<10x15xf32>, vector<15x12xf32>, vector<10x12xf32> -> vector<10x12xf32>
    %161 = vector.broadcast %158 : vector<1x12xf32> to vector<10x12xf32>
    %162 = arith.addf %160, %161 : vector<10x12xf32>
    %cst_38 = arith.constant 0.000000e+00 : f32
    %163 = vector.broadcast %cst_38 : f32 to vector<10x10xf32>
    %164 = vector.extract_strided_slice %162 {offsets = [0, 0], sizes = [10, 1], strides = [1, 1]} : vector<10x12xf32> to vector<10x1xf32>
    %165 = vector.extract_strided_slice %159 {offsets = [0, 0], sizes = [1, 10], strides = [1, 1]} : vector<12x10xf32> to vector<1x10xf32>
    %166 = vector.broadcast %164 : vector<10x1xf32> to vector<10x10xf32>
    %167 = vector.broadcast %165 : vector<1x10xf32> to vector<10x10xf32>
    %168 = arith.addf %166, %167 : vector<10x10xf32>
    %c0_39 = arith.constant 0 : index
    %169 = memref.load %arg7[%c0_39] : memref<12xf32, #tpu.memory_space<smem>>
    %170 = math.tanh %168 : vector<10x10xf32>
    %171 = vector.broadcast %169 : f32 to vector<10x10xf32>
    %172 = arith.mulf %171, %170 : vector<10x10xf32>
    %173 = arith.addf %163, %172 : vector<10x10xf32>
    %174 = vector.extract_strided_slice %162 {offsets = [0, 1], sizes = [10, 1], strides = [1, 1]} : vector<10x12xf32> to vector<10x1xf32>
    %175 = vector.extract_strided_slice %159 {offsets = [1, 0], sizes = [1, 10], strides = [1, 1]} : vector<12x10xf32> to vector<1x10xf32>
    %176 = vector.broadcast %174 : vector<10x1xf32> to vector<10x10xf32>
    %177 = vector.broadcast %175 : vector<1x10xf32> to vector<10x10xf32>
    %178 = arith.addf %176, %177 : vector<10x10xf32>
    %c1_40 = arith.constant 1 : index
    %179 = memref.load %arg7[%c1_40] : memref<12xf32, #tpu.memory_space<smem>>
    %180 = math.tanh %178 : vector<10x10xf32>
    %181 = vector.broadcast %179 : f32 to vector<10x10xf32>
    %182 = arith.mulf %181, %180 : vector<10x10xf32>
    %183 = arith.addf %173, %182 : vector<10x10xf32>
    %184 = vector.extract_strided_slice %162 {offsets = [0, 2], sizes = [10, 1], strides = [1, 1]} : vector<10x12xf32> to vector<10x1xf32>
    %185 = vector.extract_strided_slice %159 {offsets = [2, 0], sizes = [1, 10], strides = [1, 1]} : vector<12x10xf32> to vector<1x10xf32>
    %186 = vector.broadcast %184 : vector<10x1xf32> to vector<10x10xf32>
    %187 = vector.broadcast %185 : vector<1x10xf32> to vector<10x10xf32>
    %188 = arith.addf %186, %187 : vector<10x10xf32>
    %c2_41 = arith.constant 2 : index
    %189 = memref.load %arg7[%c2_41] : memref<12xf32, #tpu.memory_space<smem>>
    %190 = math.tanh %188 : vector<10x10xf32>
    %191 = vector.broadcast %189 : f32 to vector<10x10xf32>
    %192 = arith.mulf %191, %190 : vector<10x10xf32>
    %193 = arith.addf %183, %192 : vector<10x10xf32>
    %194 = vector.extract_strided_slice %162 {offsets = [0, 3], sizes = [10, 1], strides = [1, 1]} : vector<10x12xf32> to vector<10x1xf32>
    %195 = vector.extract_strided_slice %159 {offsets = [3, 0], sizes = [1, 10], strides = [1, 1]} : vector<12x10xf32> to vector<1x10xf32>
    %196 = vector.broadcast %194 : vector<10x1xf32> to vector<10x10xf32>
    %197 = vector.broadcast %195 : vector<1x10xf32> to vector<10x10xf32>
    %198 = arith.addf %196, %197 : vector<10x10xf32>
    %c3_42 = arith.constant 3 : index
    %199 = memref.load %arg7[%c3_42] : memref<12xf32, #tpu.memory_space<smem>>
    %200 = math.tanh %198 : vector<10x10xf32>
    %201 = vector.broadcast %199 : f32 to vector<10x10xf32>
    %202 = arith.mulf %201, %200 : vector<10x10xf32>
    %203 = arith.addf %193, %202 : vector<10x10xf32>
    %204 = vector.extract_strided_slice %162 {offsets = [0, 4], sizes = [10, 1], strides = [1, 1]} : vector<10x12xf32> to vector<10x1xf32>
    %205 = vector.extract_strided_slice %159 {offsets = [4, 0], sizes = [1, 10], strides = [1, 1]} : vector<12x10xf32> to vector<1x10xf32>
    %206 = vector.broadcast %204 : vector<10x1xf32> to vector<10x10xf32>
    %207 = vector.broadcast %205 : vector<1x10xf32> to vector<10x10xf32>
    %208 = arith.addf %206, %207 : vector<10x10xf32>
    %c4_43 = arith.constant 4 : index
    %209 = memref.load %arg7[%c4_43] : memref<12xf32, #tpu.memory_space<smem>>
    %210 = math.tanh %208 : vector<10x10xf32>
    %211 = vector.broadcast %209 : f32 to vector<10x10xf32>
    %212 = arith.mulf %211, %210 : vector<10x10xf32>
    %213 = arith.addf %203, %212 : vector<10x10xf32>
    %214 = vector.extract_strided_slice %162 {offsets = [0, 5], sizes = [10, 1], strides = [1, 1]} : vector<10x12xf32> to vector<10x1xf32>
    %215 = vector.extract_strided_slice %159 {offsets = [5, 0], sizes = [1, 10], strides = [1, 1]} : vector<12x10xf32> to vector<1x10xf32>
    %216 = vector.broadcast %214 : vector<10x1xf32> to vector<10x10xf32>
    %217 = vector.broadcast %215 : vector<1x10xf32> to vector<10x10xf32>
    %218 = arith.addf %216, %217 : vector<10x10xf32>
    %c5_44 = arith.constant 5 : index
    %219 = memref.load %arg7[%c5_44] : memref<12xf32, #tpu.memory_space<smem>>
    %220 = math.tanh %218 : vector<10x10xf32>
    %221 = vector.broadcast %219 : f32 to vector<10x10xf32>
    %222 = arith.mulf %221, %220 : vector<10x10xf32>
    %223 = arith.addf %213, %222 : vector<10x10xf32>
    %224 = vector.extract_strided_slice %162 {offsets = [0, 6], sizes = [10, 1], strides = [1, 1]} : vector<10x12xf32> to vector<10x1xf32>
    %225 = vector.extract_strided_slice %159 {offsets = [6, 0], sizes = [1, 10], strides = [1, 1]} : vector<12x10xf32> to vector<1x10xf32>
    %226 = vector.broadcast %224 : vector<10x1xf32> to vector<10x10xf32>
    %227 = vector.broadcast %225 : vector<1x10xf32> to vector<10x10xf32>
    %228 = arith.addf %226, %227 : vector<10x10xf32>
    %c6_45 = arith.constant 6 : index
    %229 = memref.load %arg7[%c6_45] : memref<12xf32, #tpu.memory_space<smem>>
    %230 = math.tanh %228 : vector<10x10xf32>
    %231 = vector.broadcast %229 : f32 to vector<10x10xf32>
    %232 = arith.mulf %231, %230 : vector<10x10xf32>
    %233 = arith.addf %223, %232 : vector<10x10xf32>
    %234 = vector.extract_strided_slice %162 {offsets = [0, 7], sizes = [10, 1], strides = [1, 1]} : vector<10x12xf32> to vector<10x1xf32>
    %235 = vector.extract_strided_slice %159 {offsets = [7, 0], sizes = [1, 10], strides = [1, 1]} : vector<12x10xf32> to vector<1x10xf32>
    %236 = vector.broadcast %234 : vector<10x1xf32> to vector<10x10xf32>
    %237 = vector.broadcast %235 : vector<1x10xf32> to vector<10x10xf32>
    %238 = arith.addf %236, %237 : vector<10x10xf32>
    %c7_46 = arith.constant 7 : index
    %239 = memref.load %arg7[%c7_46] : memref<12xf32, #tpu.memory_space<smem>>
    %240 = math.tanh %238 : vector<10x10xf32>
    %241 = vector.broadcast %239 : f32 to vector<10x10xf32>
    %242 = arith.mulf %241, %240 : vector<10x10xf32>
    %243 = arith.addf %233, %242 : vector<10x10xf32>
    %244 = vector.extract_strided_slice %162 {offsets = [0, 8], sizes = [10, 1], strides = [1, 1]} : vector<10x12xf32> to vector<10x1xf32>
    %245 = vector.extract_strided_slice %159 {offsets = [8, 0], sizes = [1, 10], strides = [1, 1]} : vector<12x10xf32> to vector<1x10xf32>
    %246 = vector.broadcast %244 : vector<10x1xf32> to vector<10x10xf32>
    %247 = vector.broadcast %245 : vector<1x10xf32> to vector<10x10xf32>
    %248 = arith.addf %246, %247 : vector<10x10xf32>
    %c8_47 = arith.constant 8 : index
    %249 = memref.load %arg7[%c8_47] : memref<12xf32, #tpu.memory_space<smem>>
    %250 = math.tanh %248 : vector<10x10xf32>
    %251 = vector.broadcast %249 : f32 to vector<10x10xf32>
    %252 = arith.mulf %251, %250 : vector<10x10xf32>
    %253 = arith.addf %243, %252 : vector<10x10xf32>
    %254 = vector.extract_strided_slice %162 {offsets = [0, 9], sizes = [10, 1], strides = [1, 1]} : vector<10x12xf32> to vector<10x1xf32>
    %255 = vector.extract_strided_slice %159 {offsets = [9, 0], sizes = [1, 10], strides = [1, 1]} : vector<12x10xf32> to vector<1x10xf32>
    %256 = vector.broadcast %254 : vector<10x1xf32> to vector<10x10xf32>
    %257 = vector.broadcast %255 : vector<1x10xf32> to vector<10x10xf32>
    %258 = arith.addf %256, %257 : vector<10x10xf32>
    %c9_48 = arith.constant 9 : index
    %259 = memref.load %arg7[%c9_48] : memref<12xf32, #tpu.memory_space<smem>>
    %260 = math.tanh %258 : vector<10x10xf32>
    %261 = vector.broadcast %259 : f32 to vector<10x10xf32>
    %262 = arith.mulf %261, %260 : vector<10x10xf32>
    %263 = arith.addf %253, %262 : vector<10x10xf32>
    %264 = vector.extract_strided_slice %162 {offsets = [0, 10], sizes = [10, 1], strides = [1, 1]} : vector<10x12xf32> to vector<10x1xf32>
    %265 = vector.extract_strided_slice %159 {offsets = [10, 0], sizes = [1, 10], strides = [1, 1]} : vector<12x10xf32> to vector<1x10xf32>
    %266 = vector.broadcast %264 : vector<10x1xf32> to vector<10x10xf32>
    %267 = vector.broadcast %265 : vector<1x10xf32> to vector<10x10xf32>
    %268 = arith.addf %266, %267 : vector<10x10xf32>
    %c10_49 = arith.constant 10 : index
    %269 = memref.load %arg7[%c10_49] : memref<12xf32, #tpu.memory_space<smem>>
    %270 = math.tanh %268 : vector<10x10xf32>
    %271 = vector.broadcast %269 : f32 to vector<10x10xf32>
    %272 = arith.mulf %271, %270 : vector<10x10xf32>
    %273 = arith.addf %263, %272 : vector<10x10xf32>
    %274 = vector.extract_strided_slice %162 {offsets = [0, 11], sizes = [10, 1], strides = [1, 1]} : vector<10x12xf32> to vector<10x1xf32>
    %275 = vector.extract_strided_slice %159 {offsets = [11, 0], sizes = [1, 10], strides = [1, 1]} : vector<12x10xf32> to vector<1x10xf32>
    %276 = vector.broadcast %274 : vector<10x1xf32> to vector<10x10xf32>
    %277 = vector.broadcast %275 : vector<1x10xf32> to vector<10x10xf32>
    %278 = arith.addf %276, %277 : vector<10x10xf32>
    %c11_50 = arith.constant 11 : index
    %279 = memref.load %arg7[%c11_50] : memref<12xf32, #tpu.memory_space<smem>>
    %280 = math.tanh %278 : vector<10x10xf32>
    %281 = vector.broadcast %279 : f32 to vector<10x10xf32>
    %282 = arith.mulf %281, %280 : vector<10x10xf32>
    %283 = arith.addf %273, %282 : vector<10x10xf32>
    %cst_51 = arith.constant dense<0xFF800000> : vector<10xf32>
    %284 = vector.multi_reduction <maximumf>, %283, %cst_51 [1] : vector<10x10xf32> to vector<10xf32>
    %285 = vector.shape_cast %284 : vector<10xf32> to vector<10x1xf32>
    %286 = vector.broadcast %285 : vector<10x1xf32> to vector<10x10xf32>
    %287 = arith.subf %283, %286 : vector<10x10xf32>
    %288 = math.exp %287 : vector<10x10xf32>
    %cst_52 = arith.constant dense<0.000000e+00> : vector<10xf32>
    %289 = vector.multi_reduction <add>, %288, %cst_52 [1] : vector<10x10xf32> to vector<10xf32>
    %290 = vector.shape_cast %289 : vector<10xf32> to vector<10x1xf32>
    %291 = tpu.reciprocal %290 {approx = true} : vector<10x1xf32> -> vector<10x1xf32>
    %292 = arith.mulf %290, %291 : vector<10x1xf32>
    %cst_53 = arith.constant 2.000000e+00 : f32
    %293 = vector.broadcast %cst_53 : f32 to vector<10x1xf32>
    %294 = arith.subf %293, %292 : vector<10x1xf32>
    %295 = arith.mulf %291, %294 : vector<10x1xf32>
    %296 = vector.broadcast %295 : vector<10x1xf32> to vector<10x10xf32>
    %297 = arith.mulf %288, %296 : vector<10x10xf32>
    %c1_54 = arith.constant 1 : index
    %c0_55 = arith.constant 0 : index
    %c0_56 = arith.constant 0 : index
    %298 = vector.load %arg3[%c1_54, %c0_55, %c0_56] : memref<2x8x10xf32, #tpu.memory_space<vmem>>, vector<1x8x10xf32>
    %299 = vector.shape_cast %298 : vector<1x8x10xf32> to vector<8x10xf32>
    %cst_57 = arith.constant dense<0.000000e+00> : vector<8x10xf32>
    %300 = tpu.matmul %299, %297, %cst_57 {dimension_numbers = #tpu.dot_dimension_numbers<[1], [0], [0], [1], [0, 0, 1, 1], [], []>} : vector<8x10xf32>, vector<10x10xf32>, vector<8x10xf32> -> vector<8x10xf32>
    %c1_58 = arith.constant 1 : index
    %c0_59 = arith.constant 0 : index
    %c0_60 = arith.constant 0 : index
    %301 = vector.load %arg8[%c1_58, %c0_59, %c0_60] : memref<2x8x10xf32, #tpu.memory_space<vmem>>, vector<1x8x10xf32>
    %302 = vector.shape_cast %301 : vector<1x8x10xf32> to vector<8x10xf32>
    %303 = vector.shape_cast %300 : vector<8x10xf32> to vector<1x8x10xf32>
    tpu.vector_store %arg8[%c1_58, %c0_59, %c0_60], %303 {strides = array<i32>} : memref<2x8x10xf32, #tpu.memory_space<vmem>>, vector<1x8x10xf32>,
    return
  }
  func.func @transform_0(%arg0: i32) -> (i32, i32, i32) {
    %c0_i32 = arith.constant 0 : i32
    %c0_i32_0 = arith.constant 0 : i32
    %c0_i32_1 = arith.constant 0 : i32
    return %arg0, %c0_i32, %c0_i32_0 : i32, i32, i32
  }
  func.func @transform_1(%arg0: i32) -> (i32, i32, i32) {
    %c0_i32 = arith.constant 0 : i32
    %c0_i32_0 = arith.constant 0 : i32
    %c0_i32_1 = arith.constant 0 : i32
    return %arg0, %c0_i32, %c0_i32_0 : i32, i32, i32
  }
  func.func @transform_2(%arg0: i32) -> (i32, i32, i32) {
    %c0_i32 = arith.constant 0 : i32
    %c0_i32_0 = arith.constant 0 : i32
    %c0_i32_1 = arith.constant 0 : i32
    return %arg0, %c0_i32, %c0_i32_0 : i32, i32, i32
  }
  func.func @transform_3(%arg0: i32) -> (i32, i32) {
    %c0_i32 = arith.constant 0 : i32
    %c0_i32_0 = arith.constant 0 : i32
    %c0_i32_1 = arith.constant 0 : i32
    return %c0_i32, %c0_i32_0 : i32, i32
  }
  func.func @transform_4(%arg0: i32) -> (i32, i32) {
    %c0_i32 = arith.constant 0 : i32
    %c0_i32_0 = arith.constant 0 : i32
    %c0_i32_1 = arith.constant 0 : i32
    return %c0_i32, %c0_i32_0 : i32, i32
  }
  func.func @transform_5(%arg0: i32) -> (i32, i32) {
    %c0_i32 = arith.constant 0 : i32
    %c0_i32_0 = arith.constant 0 : i32
    %c0_i32_1 = arith.constant 0 : i32
    return %c0_i32, %c0_i32_0 : i32, i32
  }
  func.func @transform_6(%arg0: i32) -> i32 {
    %c0_i32 = arith.constant 0 : i32
    %c0_i32_0 = arith.constant 0 : i32
    return %c0_i32 : i32
  }
  func.func @transform_7(%arg0: i32) -> (i32, i32, i32) {
    %c0_i32 = arith.constant 0 : i32
    %c0_i32_0 = arith.constant 0 : i32
    %c0_i32_1 = arith.constant 0 : i32
    return %arg0, %c0_i32, %c0_i32_0 : i32, i32, i32
  }
}

</mosaic_0001>

<llo_original>
// kernel: tpu_custom_call.1
$region0: #{tpu_custom_call.1}
  #allocation0 [shape = 'u32[]', space=smem, size = 0x4, offset = 0x4, fixed_abs, tag = 'smem constant byte address 0x4 - core index']
  #allocation1 [shape = 'u32[144,128]{1,0:T(1,128)}', space=vmem, size = 0x12000, scoped, tag = 'internal scratch']
  %s0 = inlined_call_operand.vmem [shape: f32[2,10,20], index: 0, kind: input, shape index: {}]
  %s1 = inlined_call_operand.vmem [shape: f32[2,10,15], index: 1, kind: input, shape index: {}]
  %s2 = inlined_call_operand.vmem [shape: f32[2,8,10], index: 2, kind: input, shape index: {}]
  %s3 = inlined_call_operand.vmem [shape: f32[12,20], index: 3, kind: input, shape index: {}]
  %s4 = inlined_call_operand.vmem [shape: f32[15,12], index: 4, kind: input, shape index: {}]
  %s5 = inlined_call_operand.vmem [shape: f32[1,12], index: 5, kind: input, shape index: {}]
  %s6 = inlined_call_operand.vmem [shape: f32[12], index: 6, kind: input, shape index: {}]
  %s7 = inlined_call_operand.hbm [shape: f32[2,8,10], index: 7, kind: output, shape index: {}]
  %s8 = sld [smem:[#allocation0]]
  $region42: #{tpu_custom_call.1} parent=0
    _
  %s10 = ssub.s32 1, %s8
  %s11 = scalar_select 0, %s10, %s8
  $region1: #{tpu_custom_call.1} parent=0
    #allocation2 [shape = 'u8[512]{0}', space=smem, size = 0x200, scoped, tag = 'input window, operand 6, single buffered']
    #allocation3 [shape = 's32[1]{0}', space=sflag, size = 0x4, scoped, tag = 'scoped memory for tpu_custom_call.1']
    #allocation4 [shape = 's32[1]{0}', space=sflag, size = 0x4, scoped, tag = 'scoped memory for tpu_custom_call.1']
    #allocation5 [shape = 'u8[8192]{0}', space=vmem, size = 0x2000, scoped, tag = 'output window, operand 0, single buffered']
    %12 = vsyncpa [#allocation4], 0
    %13 = vsyncpa [#allocation3], 0
    // Predicated region
    $region2: #{tpu_custom_call.1} parent=1 // pred_check
      _
    $region3: #{tpu_custom_call.1} parent=1 // pred_check_branch
      %15 = sbr.rel (0) target = $region5
    $region4: #{tpu_custom_call.1} parent=1 // pred_region
      _
    $region5: #{tpu_custom_call.1} parent=1 // pred_fallthru
      _
    // Predicated region
    $region6: #{tpu_custom_call.1} parent=1 // pred_check
      _
    $region7: #{tpu_custom_call.1} parent=1 // pred_check_branch
      %17 = sbr.rel (0) target = $region9
    $region8: #{tpu_custom_call.1} parent=1 // pred_region
      _
    $region9: #{tpu_custom_call.1} parent=1 // pred_fallthru
      _
    // Predicated region
    $region10: #{tpu_custom_call.1} parent=1 // pred_check
      _
    $region11: #{tpu_custom_call.1} parent=1 // pred_check_branch
      %19 = sbr.rel (0) target = $region13
    $region12: #{tpu_custom_call.1} parent=1 // pred_region
      _
    $region13: #{tpu_custom_call.1} parent=1 // pred_fallthru
      _
    // Predicated region
    $region14: #{tpu_custom_call.1} parent=1 // pred_check
      _
    $region15: #{tpu_custom_call.1} parent=1 // pred_check_branch
      %21 = sbr.rel (0) target = $region17
    $region16: #{tpu_custom_call.1} parent=1 // pred_region
      _
    $region17: #{tpu_custom_call.1} parent=1 // pred_fallthru
      _
    // Predicated region
    $region18: #{tpu_custom_call.1} parent=1 // pred_check
      _
    $region19: #{tpu_custom_call.1} parent=1 // pred_check_branch
      %23 = sbr.rel (0) target = $region21
    $region20: #{tpu_custom_call.1} parent=1 // pred_region
      _
    $region21: #{tpu_custom_call.1} parent=1 // pred_fallthru
      _
    // Predicated region
    $region22: #{tpu_custom_call.1} parent=1 // pred_check
      _
    $region23: #{tpu_custom_call.1} parent=1 // pred_check_branch
      %25 = sbr.rel (0) target = $region25
    $region24: #{tpu_custom_call.1} parent=1 // pred_region
      _
    $region25: #{tpu_custom_call.1} parent=1 // pred_fallthru
      _
    // Predicated region
    $region26: #{tpu_custom_call.1} parent=1 // pred_check
      _
    $region27: #{tpu_custom_call.1} parent=1 // pred_check_branch
      %27 = sbr.rel (0) target = $region29
    $region28: #{tpu_custom_call.1} parent=1 // pred_region
      %s29 = ssub.s32 16, 16
      %30 = vsyncadd [#allocation4], %s29
      %s32 = sshll.u32 %s6, 4
      %s33 = int_to_ptr.vmem [resolvable:$true] %s32
      %35 = dma.vmem_to_smem %s33, 16, [#allocation2], [#allocation4]
    $region29: #{tpu_custom_call.1} parent=1 // pred_fallthru
      _
    // Predicated region
    $region30: #{tpu_custom_call.1} parent=1 // pred_check
      _
    $region31: #{tpu_custom_call.1} parent=1 // pred_check_branch
      %37 = sbr.rel (0) target = $region33
    $region32: #{tpu_custom_call.1} parent=1 // pred_region
      %38 = dma.done [#allocation4], 16
    $region33: #{tpu_custom_call.1} parent=1 // pred_fallthru
      _
    %39 = sfence
    %v40 = vld [vmem:[%s0] sm:$0xff]
    %v41 = vld [vmem:[%s0 + $0x8] sm:$0x3]
    %v42 = vld [vmem:[%s1] sm:$0xff]
    %v43 = vld [vmem:[%s1 + $0x8] sm:$0x3]
    %v44 = vld [vmem:[%s3] sm:$0xff]
    %v45 = vld [vmem:[%s3 + $0x8] sm:$0xf]
    %v46 = vld [vmem:[%s4] sm:$0xff]
    %v47 = vld [vmem:[%s4 + $0x8] sm:$0x7f]
    %v48 = vld [vmem:[%s5] sm:$0x1]
    %vm49 = vcmask 162816
    %v51 = vsel %vm49, %v44, 0
    %v54 = vsel %vm49, %v45, 0
    %v57 = vsel %vm49, %v40, 0
    %v60 = vsel %vm49, %v41, 0
    %62 = vmatprep.subr.mxu0 0.0
    %63 = vmatpush1.xpose.msra.mxu0 0.0
    %64 = vmatprep.subr.mxu0 0.0
    %65 = vmatpush1.xpose.msra.mxu0 0.0
    %66 = vmatprep.subr.mxu0 0.0
    %67 = vmatpush1.xpose.msra.mxu0 0.0
    %68 = vmatprep.subr.mxu0 0.0
    %69 = vmatpush1.xpose.msra.mxu0 0.0
    %70 = vmatprep.subr.mxu0 0.0
    %71 = vmatpush1.xpose.msra.mxu0 0.0
    %72 = vmatprep.subr.mxu0 0.0
    %73 = vmatpush1.xpose.msra.mxu0 0.0
    %74 = vmatprep.subr.mxu0 0.0
    %75 = vmatpush1.xpose.msra.mxu0 0.0
    %76 = vmatprep.subr.mxu0 0.0
    %77 = vmatpush1.xpose.msra.mxu0 0.0
    %78 = vmatprep.subr.mxu0 0.0
    %79 = vmatpush1.xpose.msra.mxu0 0.0
    %80 = vmatprep.subr.mxu0 0.0
    %81 = vmatpush1.xpose.msra.mxu0 0.0
    %82 = vmatprep.subr.mxu0 0.0
    %83 = vmatpush1.xpose.msra.mxu0 0.0
    %84 = vmatprep.subr.mxu0 0.0
    %85 = vmatpush1.xpose.msra.mxu0 0.0
    %86 = vmatprep.subr.mxu0 0.0
    %87 = vmatpush1.xpose.msra.mxu0 0.0
    %88 = vmatprep.subr.mxu0 0.0
    %89 = vmatpush1.xpose.msra.mxu0 0.0
    %90 = vmatprep.subr.mxu0 0.0
    %91 = vmatpush1.xpose.msra.mxu0 %v60
    %92 = vmatprep.subr.mxu0 0.0
    %93 = vmatpush1.xpose.msra.mxu0 %v57
    %94 = vmatprep.subr.mxu0 0.0
    %95 = vmatpush2.xpose.msra.mxu0 0.0
    %96 = vmatprep.subr.mxu0 0.0
    %97 = vmatpush2.xpose.msra.mxu0 0.0
    %98 = vmatprep.subr.mxu0 0.0
    %99 = vmatpush2.xpose.msra.mxu0 0.0
    %100 = vmatprep.subr.mxu0 0.0
    %101 = vmatpush2.xpose.msra.mxu0 0.0
    %102 = vmatprep.subr.mxu0 0.0
    %103 = vmatpush2.xpose.msra.mxu0 0.0
    %104 = vmatprep.subr.mxu0 0.0
    %105 = vmatpush2.xpose.msra.mxu0 0.0
    %106 = vmatprep.subr.mxu0 0.0
    %107 = vmatpush2.xpose.msra.mxu0 0.0
    %108 = vmatprep.subr.mxu0 0.0
    %109 = vmatpush2.xpose.msra.mxu0 0.0
    %110 = vmatprep.subr.mxu0 0.0
    %111 = vmatpush2.xpose.msra.mxu0 0.0
    %112 = vmatprep.subr.mxu0 0.0
    %113 = vmatpush2.xpose.msra.mxu0 0.0
    %114 = vmatprep.subr.mxu0 0.0
    %115 = vmatpush2.xpose.msra.mxu0 0.0
    %116 = vmatprep.subr.mxu0 0.0
    %117 = vmatpush2.xpose.msra.mxu0 0.0
    %118 = vmatprep.subr.mxu0 0.0
    %119 = vmatpush2.xpose.msra.mxu0 0.0
    %120 = vmatprep.subr.mxu0 0.0
    %121 = vmatpush2.xpose.msra.mxu0 0.0
    %122 = vmatprep.subr.mxu0 0.0
    %123 = vmatpush2.xpose.msra.mxu0 0.0
    %124 = vmatprep.subr.mxu0 0.0
    %125 = vmatpush2.xpose.msra.mxu0 0.0
    %126 = vmatprep.mubr.f32.mxu0 0.0
    %127 = vmatmul.mubr.f32.gmra.mxu0 %v51
    %v128 = vpop.f32.mrf.mxu0
    %v129 = vadd.f32 0.0, %v128
    %v130 = vpop.f32.mrf.mxu0
    %131 = vmatprep.mubr.f32.mxu0 0.0
    %132 = vmatmul.mubr.f32.gmra.mxu0 %v54
    %v133 = vpop.f32.mrf.mxu0
    %v134 = vadd.f32 0.0, %v133
    %v135 = vpop.f32.mrf.mxu0
    %136 = vdwg.mxu0
    %v138 = vlaneseq
    %v139 = vshrl.u32 %v138, 7
    %v140 = vsub.s32 0, %v139
    %v141 = vrot.slane %v48, %v140
    %vm143 = vcmask 121856
    %v145 = vsel %vm143, %v42, 0
    %v148 = vsel %vm143, %v43, 0
    %vm150 = vcmask 1046528
    %v152 = vsel %vm150, %v47, 0
    %154 = vmatprep.subr.mxu0 0.0
    %155 = vmatpush1.msra.mxu0 0.0
    %156 = vmatprep.subr.mxu0 0.0
    %157 = vmatpush1.msra.mxu0 0.0
    %158 = vmatprep.subr.mxu0 0.0
    %159 = vmatpush1.msra.mxu0 0.0
    %160 = vmatprep.subr.mxu0 0.0
    %161 = vmatpush1.msra.mxu0 0.0
    %162 = vmatprep.subr.mxu0 0.0
    %163 = vmatpush1.msra.mxu0 0.0
    %164 = vmatprep.subr.mxu0 0.0
    %165 = vmatpush1.msra.mxu0 0.0
    %166 = vmatprep.subr.mxu0 0.0
    %167 = vmatpush1.msra.mxu0 0.0
    %168 = vmatprep.subr.mxu0 0.0
    %169 = vmatpush1.msra.mxu0 0.0
    %170 = vmatprep.subr.mxu0 0.0
    %171 = vmatpush1.msra.mxu0 0.0
    %172 = vmatprep.subr.mxu0 0.0
    %173 = vmatpush1.msra.mxu0 0.0
    %174 = vmatprep.subr.mxu0 0.0
    %175 = vmatpush1.msra.mxu0 0.0
    %176 = vmatprep.subr.mxu0 0.0
    %177 = vmatpush1.msra.mxu0 0.0
    %178 = vmatprep.subr.mxu0 0.0
    %179 = vmatpush1.msra.mxu0 0.0
    %180 = vmatprep.subr.mxu0 0.0
    %181 = vmatpush1.msra.mxu0 0.0
    %182 = vmatprep.subr.mxu0 0.0
    %183 = vmatpush1.msra.mxu0 %v152
    %184 = vmatprep.subr.mxu0 0.0
    %185 = vmatpush1.msra.mxu0 %v46
    %186 = vmatprep.subr.mxu0 0.0
    %187 = vmatpush2.msra.mxu0 0.0
    %188 = vmatprep.subr.mxu0 0.0
    %189 = vmatpush2.msra.mxu0 0.0
    %190 = vmatprep.subr.mxu0 0.0
    %191 = vmatpush2.msra.mxu0 0.0
    %192 = vmatprep.subr.mxu0 0.0
    %193 = vmatpush2.msra.mxu0 0.0
    %194 = vmatprep.subr.mxu0 0.0
    %195 = vmatpush2.msra.mxu0 0.0
    %196 = vmatprep.subr.mxu0 0.0
    %197 = vmatpush2.msra.mxu0 0.0
    %198 = vmatprep.subr.mxu0 0.0
    %199 = vmatpush2.msra.mxu0 0.0
    %200 = vmatprep.subr.mxu0 0.0
    %201 = vmatpush2.msra.mxu0 0.0
    %202 = vmatprep.subr.mxu0 0.0
    %203 = vmatpush2.msra.mxu0 0.0
    %204 = vmatprep.subr.mxu0 0.0
    %205 = vmatpush2.msra.mxu0 0.0
    %206 = vmatprep.subr.mxu0 0.0
    %207 = vmatpush2.msra.mxu0 0.0
    %208 = vmatprep.subr.mxu0 0.0
    %209 = vmatpush2.msra.mxu0 0.0
    %210 = vmatprep.subr.mxu0 0.0
    %211 = vmatpush2.msra.mxu0 0.0
    %212 = vmatprep.subr.mxu0 0.0
    %213 = vmatpush2.msra.mxu0 0.0
    %214 = vmatprep.subr.mxu0 0.0
    %215 = vmatpush2.msra.mxu0 0.0
    %216 = vmatprep.subr.mxu0 0.0
    %217 = vmatpush2.msra.mxu0 0.0
    %218 = vmatprep.mubr.f32.mxu0 0.0
    %219 = vmatmul.mubr.f32.gmra.mxu0 %v145
    %v220 = vpop.f32.mrf.mxu0
    %v221 = vadd.f32 %v141, %v220
    %v222 = vpop.f32.mrf.mxu0
    %223 = vmatprep.mubr.f32.mxu0 0.0
    %224 = vmatmul.mubr.f32.gmra.mxu0 %v148
    %v225 = vpop.f32.mrf.mxu0
    %v226 = vadd.f32 %v141, %v225
    %v227 = vpop.f32.mrf.mxu0
    %228 = vdwg.mxu0
    %230 = vset.pattern.permute.xlu0 0
    %231 = vperm.xlu0 %230, %v221
    %v232 = vpop.permute.xlu0 %231
    %235 = vset.pattern.permute.xlu0 0
    %236 = vperm.xlu0 %235, %v226
    %v237 = vpop.permute.xlu0 %236
    %v239 = vlaneseq
    %v240 = vshrl.u32 %v239, 7
    %v241 = vsub.s32 0, %v240
    %v242 = vrot.slane %v129, %v241
    %v243 = vadd.f32 %v232, %v242
    %v244 = vadd.f32 %v237, %v242
    %s245 = sld [smem:[#allocation2]]
    %v246 = vtanh.pop %v243
    %v247 = vtanh.pop %v244
    %v248 = vstv %s245
    %v249 = vmul.f32 %v248, %v246
    %v250 = vmul.f32 %v248, %v247
    %v251 = vadd.f32 %v249, 0.0
    %v252 = vadd.f32 %v250, 0.0
    %253 = vset.pattern.permute.xlu0 1
    %254 = vperm.xlu0 %253, %v221
    %v255 = vpop.permute.xlu0 %254
    %257 = vset.pattern.permute.xlu0 1
    %258 = vperm.xlu0 %257, %v226
    %v259 = vpop.permute.xlu0 %258
    %v261 = vlaneseq
    %v262 = vshrl.u32 %v261, 7
    %v263 = vsub.s32 1, %v262
    %v264 = vrot.slane %v129, %v263
    %v265 = vadd.f32 %v255, %v264
    %v266 = vadd.f32 %v259, %v264
    %s267 = sld [smem:[#allocation2 + $0x1]]
    %v268 = vtanh.pop %v265
    %v269 = vtanh.pop %v266
    %v270 = vstv %s267
    %v271 = vmul.f32 %v270, %v268
    %v272 = vmul.f32 %v270, %v269
    %v273 = vadd.f32 %v251, %v271
    %v274 = vadd.f32 %v252, %v272
    %275 = vset.pattern.permute.xlu0 2
    %276 = vperm.xlu0 %275, %v221
    %v277 = vpop.permute.xlu0 %276
    %279 = vset.pattern.permute.xlu0 2
    %280 = vperm.xlu0 %279, %v226
    %v281 = vpop.permute.xlu0 %280
    %v283 = vlaneseq
    %v284 = vshrl.u32 %v283, 7
    %v285 = vsub.s32 2, %v284
    %v286 = vrot.slane %v129, %v285
    %v287 = vadd.f32 %v277, %v286
    %v288 = vadd.f32 %v281, %v286
    %s289 = sld [smem:[#allocation2 + $0x2]]
    %v290 = vtanh.pop %v287
    %v291 = vtanh.pop %v288
    %v292 = vstv %s289
    %v293 = vmul.f32 %v292, %v290
    %v294 = vmul.f32 %v292, %v291
    %v295 = vadd.f32 %v273, %v293
    %v296 = vadd.f32 %v274, %v294
    %297 = vset.pattern.permute.xlu0 3
    %298 = vperm.xlu0 %297, %v221
    %v299 = vpop.permute.xlu0 %298
    %301 = vset.pattern.permute.xlu0 3
    %302 = vperm.xlu0 %301, %v226
    %v303 = vpop.permute.xlu0 %302
    %v305 = vlaneseq
    %v306 = vshrl.u32 %v305, 7
    %v307 = vsub.s32 3, %v306
    %v308 = vrot.slane %v129, %v307
    %v309 = vadd.f32 %v299, %v308
    %v310 = vadd.f32 %v303, %v308
    %s311 = sld [smem:[#allocation2 + $0x3]]
    %v312 = vtanh.pop %v309
    %v313 = vtanh.pop %v310
    %v314 = vstv %s311
    %v315 = vmul.f32 %v314, %v312
    %v316 = vmul.f32 %v314, %v313
    %v317 = vadd.f32 %v295, %v315
    %v318 = vadd.f32 %v296, %v316
    %319 = vset.pattern.permute.xlu0 4
    %320 = vperm.xlu0 %319, %v221
    %v321 = vpop.permute.xlu0 %320
    %323 = vset.pattern.permute.xlu0 4
    %324 = vperm.xlu0 %323, %v226
    %v325 = vpop.permute.xlu0 %324
    %v327 = vlaneseq
    %v328 = vshrl.u32 %v327, 7
    %v329 = vsub.s32 4, %v328
    %v330 = vrot.slane %v129, %v329
    %v331 = vadd.f32 %v321, %v330
    %v332 = vadd.f32 %v325, %v330
    %s333 = sld [smem:[#allocation2 + $0x4]]
    %v334 = vtanh.pop %v331
    %v335 = vtanh.pop %v332
    %v336 = vstv %s333
    %v337 = vmul.f32 %v336, %v334
    %v338 = vmul.f32 %v336, %v335
    %v339 = vadd.f32 %v317, %v337
    %v340 = vadd.f32 %v318, %v338
    %341 = vset.pattern.permute.xlu0 5
    %342 = vperm.xlu0 %341, %v221
    %v343 = vpop.permute.xlu0 %342
    %345 = vset.pattern.permute.xlu0 5
    %346 = vperm.xlu0 %345, %v226
    %v347 = vpop.permute.xlu0 %346
    %v349 = vlaneseq
    %v350 = vshrl.u32 %v349, 7
    %v351 = vsub.s32 5, %v350
    %v352 = vrot.slane %v129, %v351
    %v353 = vadd.f32 %v343, %v352
    %v354 = vadd.f32 %v347, %v352
    %s355 = sld [smem:[#allocation2 + $0x5]]
    %v356 = vtanh.pop %v353
    %v357 = vtanh.pop %v354
    %v358 = vstv %s355
    %v359 = vmul.f32 %v358, %v356
    %v360 = vmul.f32 %v358, %v357
    %v361 = vadd.f32 %v339, %v359
    %v362 = vadd.f32 %v340, %v360
    %363 = vset.pattern.permute.xlu0 6
    %364 = vperm.xlu0 %363, %v221
    %v365 = vpop.permute.xlu0 %364
    %367 = vset.pattern.permute.xlu0 6
    %368 = vperm.xlu0 %367, %v226
    %v369 = vpop.permute.xlu0 %368
    %v371 = vlaneseq
    %v372 = vshrl.u32 %v371, 7
    %v373 = vsub.s32 6, %v372
    %v374 = vrot.slane %v129, %v373
    %v375 = vadd.f32 %v365, %v374
    %v376 = vadd.f32 %v369, %v374
    %s377 = sld [smem:[#allocation2 + $0x6]]
    %v378 = vtanh.pop %v375
    %v379 = vtanh.pop %v376
    %v380 = vstv %s377
    %v381 = vmul.f32 %v380, %v378
    %v382 = vmul.f32 %v380, %v379
    %v383 = vadd.f32 %v361, %v381
    %v384 = vadd.f32 %v362, %v382
    %385 = vset.pattern.permute.xlu0 7
    %386 = vperm.xlu0 %385, %v221
    %v387 = vpop.permute.xlu0 %386
    %389 = vset.pattern.permute.xlu0 7
    %390 = vperm.xlu0 %389, %v226
    %v391 = vpop.permute.xlu0 %390
    %v393 = vlaneseq
    %v394 = vshrl.u32 %v393, 7
    %v395 = vsub.s32 7, %v394
    %v396 = vrot.slane %v129, %v395
    %v397 = vadd.f32 %v387, %v396
    %v398 = vadd.f32 %v391, %v396
    %s399 = sld [smem:[#allocation2 + $0x7]]
    %v400 = vtanh.pop %v397
    %v401 = vtanh.pop %v398
    %v402 = vstv %s399
    %v403 = vmul.f32 %v402, %v400
    %v404 = vmul.f32 %v402, %v401
    %v405 = vadd.f32 %v383, %v403
    %v406 = vadd.f32 %v384, %v404
    %407 = vset.pattern.permute.xlu0 8
    %408 = vperm.xlu0 %407, %v221
    %v409 = vpop.permute.xlu0 %408
    %411 = vset.pattern.permute.xlu0 8
    %412 = vperm.xlu0 %411, %v226
    %v413 = vpop.permute.xlu0 %412
    %v415 = vlaneseq
    %v416 = vshrl.u32 %v415, 7
    %v417 = vsub.s32 0, %v416
    %v418 = vrot.slane %v134, %v417
    %v419 = vadd.f32 %v409, %v418
    %v420 = vadd.f32 %v413, %v418
    %s421 = sld [smem:[#allocation2 + $0x8]]
    %v422 = vtanh.pop %v419
    %v423 = vtanh.pop %v420
    %v424 = vstv %s421
    %v425 = vmul.f32 %v424, %v422
    %v426 = vmul.f32 %v424, %v423
    %v427 = vadd.f32 %v405, %v425
    %v428 = vadd.f32 %v406, %v426
    %429 = vset.pattern.permute.xlu0 9
    %430 = vperm.xlu0 %429, %v221
    %v431 = vpop.permute.xlu0 %430
    %433 = vset.pattern.permute.xlu0 9
    %434 = vperm.xlu0 %433, %v226
    %v435 = vpop.permute.xlu0 %434
    %v437 = vlaneseq
    %v438 = vshrl.u32 %v437, 7
    %v439 = vsub.s32 1, %v438
    %v440 = vrot.slane %v134, %v439
    %v441 = vadd.f32 %v431, %v440
    %v442 = vadd.f32 %v435, %v440
    %s443 = sld [smem:[#allocation2 + $0x9]]
    %v444 = vtanh.pop %v441
    %v445 = vtanh.pop %v442
    %v446 = vstv %s443
    %v447 = vmul.f32 %v446, %v444
    %v448 = vmul.f32 %v446, %v445
    %v449 = vadd.f32 %v427, %v447
    %v450 = vadd.f32 %v428, %v448
    %451 = vset.pattern.permute.xlu0 10
    %452 = vperm.xlu0 %451, %v221
    %v453 = vpop.permute.xlu0 %452
    %455 = vset.pattern.permute.xlu0 10
    %456 = vperm.xlu0 %455, %v226
    %v457 = vpop.permute.xlu0 %456
    %v459 = vlaneseq
    %v460 = vshrl.u32 %v459, 7
    %v461 = vsub.s32 2, %v460
    %v462 = vrot.slane %v134, %v461
    %v463 = vadd.f32 %v453, %v462
    %v464 = vadd.f32 %v457, %v462
    %s465 = sld [smem:[#allocation2 + $0xa]]
    %v466 = vtanh.pop %v463
    %v467 = vtanh.pop %v464
    %v468 = vstv %s465
    %v469 = vmul.f32 %v468, %v466
    %v470 = vmul.f32 %v468, %v467
    %v471 = vadd.f32 %v449, %v469
    %v472 = vadd.f32 %v450, %v470
    %473 = vset.pattern.permute.xlu0 11
    %474 = vperm.xlu0 %473, %v221
    %v475 = vpop.permute.xlu0 %474
    %477 = vset.pattern.permute.xlu0 11
    %478 = vperm.xlu0 %477, %v226
    %v479 = vpop.permute.xlu0 %478
    %v481 = vlaneseq
    %v482 = vshrl.u32 %v481, 7
    %v483 = vsub.s32 3, %v482
    %v484 = vrot.slane %v134, %v483
    %v485 = vadd.f32 %v475, %v484
    %v486 = vadd.f32 %v479, %v484
    %s487 = sld [smem:[#allocation2 + $0xb]]
    %v488 = vtanh.pop %v485
    %v489 = vtanh.pop %v486
    %v490 = vstv %s487
    %v491 = vmul.f32 %v490, %v488
    %v492 = vmul.f32 %v490, %v489
    %v493 = vadd.f32 %v471, %v491
    %v494 = vadd.f32 %v472, %v492
    %vm495 = vcmask 80896
    %v496 = vsel %vm495, %v493, -inf
    %497 = vmax.xlane.f32.xlu0 %v496
    %v498 = vpop.xlane.xlu0 %497
    %vm499 = vcmask 74752
    %v500 = vsel %vm499, %v494, -inf
    %501 = vmax.xlane.f32.xlu0 %v500
    %v502 = vpop.xlane.xlu0 %501
    %v503 = vsub.f32 %v493, %v498
    %v504 = vsub.f32 %v494, %v502
    %v505 = vmul.f32 %v503, 1.442695
    %v506 = vpow.pop %v505
    %v507 = vmul.f32 %v504, 1.442695
    %v508 = vpow.pop %v507
    %v509 = vsel %vm495, %v506, 0.0
    %510 = vadd.xlane.f32.xlu0 %v509
    %v511 = vpop.xlane.xlu0 %510
    %v512 = vsel %vm499, %v508, 0.0
    %513 = vadd.xlane.f32.xlu0 %v512
    %v514 = vpop.xlane.xlu0 %513
    %v515 = vrcp.pop %v511
    %v516 = vrcp.pop %v514
    %v517 = vmul.f32 %v511, %v515
    %v518 = vmul.f32 %v514, %v516
    %v519 = vsub.f32 2.0, %v517
    %v520 = vsub.f32 2.0, %v518
    %v521 = vmul.f32 %v515, %v519
    %v522 = vmul.f32 %v516, %v520
    %v523 = vmul.f32 %v506, %v521
    %v524 = vmul.f32 %v508, %v522
    %v525 = vld [vmem:[%s2] sm:$0xff]
    %v527 = vsel %vm495, %v525, 0
    %vm529 = vcmask 1041408
    %v531 = vsel %vm529, %v524, 0
    %533 = vmatprep.subr.mxu0 0.0
    %534 = vmatpush1.msra.mxu0 0.0
    %535 = vmatprep.subr.mxu0 0.0
    %536 = vmatpush1.msra.mxu0 0.0
    %537 = vmatprep.subr.mxu0 0.0
    %538 = vmatpush1.msra.mxu0 0.0
    %539 = vmatprep.subr.mxu0 0.0
    %540 = vmatpush1.msra.mxu0 0.0
    %541 = vmatprep.subr.mxu0 0.0
    %542 = vmatpush1.msra.mxu0 0.0
    %543 = vmatprep.subr.mxu0 0.0
    %544 = vmatpush1.msra.mxu0 0.0
    %545 = vmatprep.subr.mxu0 0.0
    %546 = vmatpush1.msra.mxu0 0.0
    %547 = vmatprep.subr.mxu0 0.0
    %548 = vmatpush1.msra.mxu0 0.0
    %549 = vmatprep.subr.mxu0 0.0
    %550 = vmatpush1.msra.mxu0 0.0
    %551 = vmatprep.subr.mxu0 0.0
    %552 = vmatpush1.msra.mxu0 0.0
    %553 = vmatprep.subr.mxu0 0.0
    %554 = vmatpush1.msra.mxu0 0.0
    %555 = vmatprep.subr.mxu0 0.0
    %556 = vmatpush1.msra.mxu0 0.0
    %557 = vmatprep.subr.mxu0 0.0
    %558 = vmatpush1.msra.mxu0 0.0
    %559 = vmatprep.subr.mxu0 0.0
    %560 = vmatpush1.msra.mxu0 0.0
    %561 = vmatprep.subr.mxu0 0.0
    %562 = vmatpush1.msra.mxu0 %v531
    %563 = vmatprep.subr.mxu0 0.0
    %564 = vmatpush1.msra.mxu0 %v523
    %565 = vmatprep.subr.mxu0 0.0
    %566 = vmatpush2.msra.mxu0 0.0
    %567 = vmatprep.subr.mxu0 0.0
    %568 = vmatpush2.msra.mxu0 0.0
    %569 = vmatprep.subr.mxu0 0.0
    %570 = vmatpush2.msra.mxu0 0.0
    %571 = vmatprep.subr.mxu0 0.0
    %572 = vmatpush2.msra.mxu0 0.0
    %573 = vmatprep.subr.mxu0 0.0
    %574 = vmatpush2.msra.mxu0 0.0
    %575 = vmatprep.subr.mxu0 0.0
    %576 = vmatpush2.msra.mxu0 0.0
    %577 = vmatprep.subr.mxu0 0.0
    %578 = vmatpush2.msra.mxu0 0.0
    %579 = vmatprep.subr.mxu0 0.0
    %580 = vmatpush2.msra.mxu0 0.0
    %581 = vmatprep.subr.mxu0 0.0
    %582 = vmatpush2.msra.mxu0 0.0
    %583 = vmatprep.subr.mxu0 0.0
    %584 = vmatpush2.msra.mxu0 0.0
    %585 = vmatprep.subr.mxu0 0.0
    %586 = vmatpush2.msra.mxu0 0.0
    %587 = vmatprep.subr.mxu0 0.0
    %588 = vmatpush2.msra.mxu0 0.0
    %589 = vmatprep.subr.mxu0 0.0
    %590 = vmatpush2.msra.mxu0 0.0
    %591 = vmatprep.subr.mxu0 0.0
    %592 = vmatpush2.msra.mxu0 0.0
    %593 = vmatprep.subr.mxu0 0.0
    %594 = vmatpush2.msra.mxu0 0.0
    %595 = vmatprep.subr.mxu0 0.0
    %596 = vmatpush2.msra.mxu0 0.0
    %597 = vmatprep.mubr.f32.mxu0 0.0
    %598 = vmatmul.mubr.f32.gmra.mxu0 %v527
    %v599 = vpop.f32.mrf.mxu0
    %v600 = vadd.f32 0.0, %v599
    %v601 = vpop.f32.mrf.mxu0
    %602 = vdwg.mxu0
    %603 = vst.msk [vmem:[#allocation5] sm:$0xff] %vm495, %v600
    %s604 = scalar_lea.vmem %s0, 16
    %v605 = vld [vmem:[%s604] sm:$0xff]
    %v606 = vld [vmem:[%s604 + $0x8] sm:$0x3]
    %s607 = scalar_lea.vmem %s1, 16
    %v608 = vld [vmem:[%s607] sm:$0xff]
    %v609 = vld [vmem:[%s607 + $0x8] sm:$0x3]
    %v610 = vld [vmem:[%s3] sm:$0xff]
    %v611 = vld [vmem:[%s3 + $0x8] sm:$0xf]
    %v612 = vld [vmem:[%s4] sm:$0xff]
    %v613 = vld [vmem:[%s4 + $0x8] sm:$0x7f]
    %v614 = vld [vmem:[%s5] sm:$0x1]
    %v616 = vsel %vm49, %v610, 0
    %v619 = vsel %vm49, %v611, 0
    %v622 = vsel %vm49, %v605, 0
    %v625 = vsel %vm49, %v606, 0
    %627 = vmatprep.subr.mxu0 0.0
    %628 = vmatpush1.xpose.msra.mxu0 0.0
    %629 = vmatprep.subr.mxu0 0.0
    %630 = vmatpush1.xpose.msra.mxu0 0.0
    %631 = vmatprep.subr.mxu0 0.0
    %632 = vmatpush1.xpose.msra.mxu0 0.0
    %633 = vmatprep.subr.mxu0 0.0
    %634 = vmatpush1.xpose.msra.mxu0 0.0
    %635 = vmatprep.subr.mxu0 0.0
    %636 = vmatpush1.xpose.msra.mxu0 0.0
    %637 = vmatprep.subr.mxu0 0.0
    %638 = vmatpush1.xpose.msra.mxu0 0.0
    %639 = vmatprep.subr.mxu0 0.0
    %640 = vmatpush1.xpose.msra.mxu0 0.0
    %641 = vmatprep.subr.mxu0 0.0
    %642 = vmatpush1.xpose.msra.mxu0 0.0
    %643 = vmatprep.subr.mxu0 0.0
    %644 = vmatpush1.xpose.msra.mxu0 0.0
    %645 = vmatprep.subr.mxu0 0.0
    %646 = vmatpush1.xpose.msra.mxu0 0.0
    %647 = vmatprep.subr.mxu0 0.0
    %648 = vmatpush1.xpose.msra.mxu0 0.0
    %649 = vmatprep.subr.mxu0 0.0
    %650 = vmatpush1.xpose.msra.mxu0 0.0
    %651 = vmatprep.subr.mxu0 0.0
    %652 = vmatpush1.xpose.msra.mxu0 0.0
    %653 = vmatprep.subr.mxu0 0.0
    %654 = vmatpush1.xpose.msra.mxu0 0.0
    %655 = vmatprep.subr.mxu0 0.0
    %656 = vmatpush1.xpose.msra.mxu0 %v625
    %657 = vmatprep.subr.mxu0 0.0
    %658 = vmatpush1.xpose.msra.mxu0 %v622
    %659 = vmatprep.subr.mxu0 0.0
    %660 = vmatpush2.xpose.msra.mxu0 0.0
    %661 = vmatprep.subr.mxu0 0.0
    %662 = vmatpush2.xpose.msra.mxu0 0.0
    %663 = vmatprep.subr.mxu0 0.0
    %664 = vmatpush2.xpose.msra.mxu0 0.0
    %665 = vmatprep.subr.mxu0 0.0
    %666 = vmatpush2.xpose.msra.mxu0 0.0
    %667 = vmatprep.subr.mxu0 0.0
    %668 = vmatpush2.xpose.msra.mxu0 0.0
    %669 = vmatprep.subr.mxu0 0.0
    %670 = vmatpush2.xpose.msra.mxu0 0.0
    %671 = vmatprep.subr.mxu0 0.0
    %672 = vmatpush2.xpose.msra.mxu0 0.0
    %673 = vmatprep.subr.mxu0 0.0
    %674 = vmatpush2.xpose.msra.mxu0 0.0
    %675 = vmatprep.subr.mxu0 0.0
    %676 = vmatpush2.xpose.msra.mxu0 0.0
    %677 = vmatprep.subr.mxu0 0.0
    %678 = vmatpush2.xpose.msra.mxu0 0.0
    %679 = vmatprep.subr.mxu0 0.0
    %680 = vmatpush2.xpose.msra.mxu0 0.0
    %681 = vmatprep.subr.mxu0 0.0
    %682 = vmatpush2.xpose.msra.mxu0 0.0
    %683 = vmatprep.subr.mxu0 0.0
    %684 = vmatpush2.xpose.msra.mxu0 0.0
    %685 = vmatprep.subr.mxu0 0.0
    %686 = vmatpush2.xpose.msra.mxu0 0.0
    %687 = vmatprep.subr.mxu0 0.0
    %688 = vmatpush2.xpose.msra.mxu0 0.0
    %689 = vmatprep.subr.mxu0 0.0
    %690 = vmatpush2.xpose.msra.mxu0 0.0
    %691 = vmatprep.mubr.f32.mxu0 0.0
    %692 = vmatmul.mubr.f32.gmra.mxu0 %v616
    %v693 = vpop.f32.mrf.mxu0
    %v694 = vadd.f32 0.0, %v693
    %v695 = vpop.f32.mrf.mxu0
    %696 = vmatprep.mubr.f32.mxu0 0.0
    %697 = vmatmul.mubr.f32.gmra.mxu0 %v619
    %v698 = vpop.f32.mrf.mxu0
    %v699 = vadd.f32 0.0, %v698
    %v700 = vpop.f32.mrf.mxu0
    %701 = vdwg.mxu0
    %v703 = vlaneseq
    %v704 = vshrl.u32 %v703, 7
    %v705 = vsub.s32 0, %v704
    %v706 = vrot.slane %v614, %v705
    %v709 = vsel %vm143, %v608, 0
    %v712 = vsel %vm143, %v609, 0
    %v715 = vsel %vm150, %v613, 0
    %717 = vmatprep.subr.mxu0 0.0
    %718 = vmatpush1.msra.mxu0 0.0
    %719 = vmatprep.subr.mxu0 0.0
    %720 = vmatpush1.msra.mxu0 0.0
    %721 = vmatprep.subr.mxu0 0.0
    %722 = vmatpush1.msra.mxu0 0.0
    %723 = vmatprep.subr.mxu0 0.0
    %724 = vmatpush1.msra.mxu0 0.0
    %725 = vmatprep.subr.mxu0 0.0
    %726 = vmatpush1.msra.mxu0 0.0
    %727 = vmatprep.subr.mxu0 0.0
    %728 = vmatpush1.msra.mxu0 0.0
    %729 = vmatprep.subr.mxu0 0.0
    %730 = vmatpush1.msra.mxu0 0.0
    %731 = vmatprep.subr.mxu0 0.0
    %732 = vmatpush1.msra.mxu0 0.0
    %733 = vmatprep.subr.mxu0 0.0
    %734 = vmatpush1.msra.mxu0 0.0
    %735 = vmatprep.subr.mxu0 0.0
    %736 = vmatpush1.msra.mxu0 0.0
    %737 = vmatprep.subr.mxu0 0.0
    %738 = vmatpush1.msra.mxu0 0.0
    %739 = vmatprep.subr.mxu0 0.0
    %740 = vmatpush1.msra.mxu0 0.0
    %741 = vmatprep.subr.mxu0 0.0
    %742 = vmatpush1.msra.mxu0 0.0
    %743 = vmatprep.subr.mxu0 0.0
    %744 = vmatpush1.msra.mxu0 0.0
    %745 = vmatprep.subr.mxu0 0.0
    %746 = vmatpush1.msra.mxu0 %v715
    %747 = vmatprep.subr.mxu0 0.0
    %748 = vmatpush1.msra.mxu0 %v612
    %749 = vmatprep.subr.mxu0 0.0
    %750 = vmatpush2.msra.mxu0 0.0
    %751 = vmatprep.subr.mxu0 0.0
    %752 = vmatpush2.msra.mxu0 0.0
    %753 = vmatprep.subr.mxu0 0.0
    %754 = vmatpush2.msra.mxu0 0.0
    %755 = vmatprep.subr.mxu0 0.0
    %756 = vmatpush2.msra.mxu0 0.0
    %757 = vmatprep.subr.mxu0 0.0
    %758 = vmatpush2.msra.mxu0 0.0
    %759 = vmatprep.subr.mxu0 0.0
    %760 = vmatpush2.msra.mxu0 0.0
    %761 = vmatprep.subr.mxu0 0.0
    %762 = vmatpush2.msra.mxu0 0.0
    %763 = vmatprep.subr.mxu0 0.0
    %764 = vmatpush2.msra.mxu0 0.0
    %765 = vmatprep.subr.mxu0 0.0
    %766 = vmatpush2.msra.mxu0 0.0
    %767 = vmatprep.subr.mxu0 0.0
    %768 = vmatpush2.msra.mxu0 0.0
    %769 = vmatprep.subr.mxu0 0.0
    %770 = vmatpush2.msra.mxu0 0.0
    %771 = vmatprep.subr.mxu0 0.0
    %772 = vmatpush2.msra.mxu0 0.0
    %773 = vmatprep.subr.mxu0 0.0
    %774 = vmatpush2.msra.mxu0 0.0
    %775 = vmatprep.subr.mxu0 0.0
    %776 = vmatpush2.msra.mxu0 0.0
    %777 = vmatprep.subr.mxu0 0.0
    %778 = vmatpush2.msra.mxu0 0.0
    %779 = vmatprep.subr.mxu0 0.0
    %780 = vmatpush2.msra.mxu0 0.0
    %781 = vmatprep.mubr.f32.mxu0 0.0
    %782 = vmatmul.mubr.f32.gmra.mxu0 %v709
    %v783 = vpop.f32.mrf.mxu0
    %v784 = vadd.f32 %v706, %v783
    %v785 = vpop.f32.mrf.mxu0
    %786 = vmatprep.mubr.f32.mxu0 0.0
    %787 = vmatmul.mubr.f32.gmra.mxu0 %v712
    %v788 = vpop.f32.mrf.mxu0
    %v789 = vadd.f32 %v706, %v788
    %v790 = vpop.f32.mrf.mxu0
    %791 = vdwg.mxu0
    %793 = vset.pattern.permute.xlu0 0
    %794 = vperm.xlu0 %793, %v784
    %v795 = vpop.permute.xlu0 %794
    %798 = vset.pattern.permute.xlu0 0
    %799 = vperm.xlu0 %798, %v789
    %v800 = vpop.permute.xlu0 %799
    %v802 = vlaneseq
    %v803 = vshrl.u32 %v802, 7
    %v804 = vsub.s32 0, %v803
    %v805 = vrot.slane %v694, %v804
    %v806 = vadd.f32 %v795, %v805
    %v807 = vadd.f32 %v800, %v805
    %s808 = sld [smem:[#allocation2]]
    %v809 = vtanh.pop %v806
    %v810 = vtanh.pop %v807
    %v811 = vstv %s808
    %v812 = vmul.f32 %v811, %v809
    %v813 = vmul.f32 %v811, %v810
    %v814 = vadd.f32 %v812, 0.0
    %v815 = vadd.f32 %v813, 0.0
    %816 = vset.pattern.permute.xlu0 1
    %817 = vperm.xlu0 %816, %v784
    %v818 = vpop.permute.xlu0 %817
    %820 = vset.pattern.permute.xlu0 1
    %821 = vperm.xlu0 %820, %v789
    %v822 = vpop.permute.xlu0 %821
    %v824 = vlaneseq
    %v825 = vshrl.u32 %v824, 7
    %v826 = vsub.s32 1, %v825
    %v827 = vrot.slane %v694, %v826
    %v828 = vadd.f32 %v818, %v827
    %v829 = vadd.f32 %v822, %v827
    %s830 = sld [smem:[#allocation2 + $0x1]]
    %v831 = vtanh.pop %v828
    %v832 = vtanh.pop %v829
    %v833 = vstv %s830
    %v834 = vmul.f32 %v833, %v831
    %v835 = vmul.f32 %v833, %v832
    %v836 = vadd.f32 %v814, %v834
    %v837 = vadd.f32 %v815, %v835
    %838 = vset.pattern.permute.xlu0 2
    %839 = vperm.xlu0 %838, %v784
    %v840 = vpop.permute.xlu0 %839
    %842 = vset.pattern.permute.xlu0 2
    %843 = vperm.xlu0 %842, %v789
    %v844 = vpop.permute.xlu0 %843
    %v846 = vlaneseq
    %v847 = vshrl.u32 %v846, 7
    %v848 = vsub.s32 2, %v847
    %v849 = vrot.slane %v694, %v848
    %v850 = vadd.f32 %v840, %v849
    %v851 = vadd.f32 %v844, %v849
    %s852 = sld [smem:[#allocation2 + $0x2]]
    %v853 = vtanh.pop %v850
    %v854 = vtanh.pop %v851
    %v855 = vstv %s852
    %v856 = vmul.f32 %v855, %v853
    %v857 = vmul.f32 %v855, %v854
    %v858 = vadd.f32 %v836, %v856
    %v859 = vadd.f32 %v837, %v857
    %860 = vset.pattern.permute.xlu0 3
    %861 = vperm.xlu0 %860, %v784
    %v862 = vpop.permute.xlu0 %861
    %864 = vset.pattern.permute.xlu0 3
    %865 = vperm.xlu0 %864, %v789
    %v866 = vpop.permute.xlu0 %865
    %v868 = vlaneseq
    %v869 = vshrl.u32 %v868, 7
    %v870 = vsub.s32 3, %v869
    %v871 = vrot.slane %v694, %v870
    %v872 = vadd.f32 %v862, %v871
    %v873 = vadd.f32 %v866, %v871
    %s874 = sld [smem:[#allocation2 + $0x3]]
    %v875 = vtanh.pop %v872
    %v876 = vtanh.pop %v873
    %v877 = vstv %s874
    %v878 = vmul.f32 %v877, %v875
    %v879 = vmul.f32 %v877, %v876
    %v880 = vadd.f32 %v858, %v878
    %v881 = vadd.f32 %v859, %v879
    %882 = vset.pattern.permute.xlu0 4
    %883 = vperm.xlu0 %882, %v784
    %v884 = vpop.permute.xlu0 %883
    %886 = vset.pattern.permute.xlu0 4
    %887 = vperm.xlu0 %886, %v789
    %v888 = vpop.permute.xlu0 %887
    %v890 = vlaneseq
    %v891 = vshrl.u32 %v890, 7
    %v892 = vsub.s32 4, %v891
    %v893 = vrot.slane %v694, %v892
    %v894 = vadd.f32 %v884, %v893
    %v895 = vadd.f32 %v888, %v893
    %s896 = sld [smem:[#allocation2 + $0x4]]
    %v897 = vtanh.pop %v894
    %v898 = vtanh.pop %v895
    %v899 = vstv %s896
    %v900 = vmul.f32 %v899, %v897
    %v901 = vmul.f32 %v899, %v898
    %v902 = vadd.f32 %v880, %v900
    %v903 = vadd.f32 %v881, %v901
    %904 = vset.pattern.permute.xlu0 5
    %905 = vperm.xlu0 %904, %v784
    %v906 = vpop.permute.xlu0 %905
    %908 = vset.pattern.permute.xlu0 5
    %909 = vperm.xlu0 %908, %v789
    %v910 = vpop.permute.xlu0 %909
    %v912 = vlaneseq
    %v913 = vshrl.u32 %v912, 7
    %v914 = vsub.s32 5, %v913
    %v915 = vrot.slane %v694, %v914
    %v916 = vadd.f32 %v906, %v915
    %v917 = vadd.f32 %v910, %v915
    %s918 = sld [smem:[#allocation2 + $0x5]]
    %v919 = vtanh.pop %v916
    %v920 = vtanh.pop %v917
    %v921 = vstv %s918
    %v922 = vmul.f32 %v921, %v919
    %v923 = vmul.f32 %v921, %v920
    %v924 = vadd.f32 %v902, %v922
    %v925 = vadd.f32 %v903, %v923
    %926 = vset.pattern.permute.xlu0 6
    %927 = vperm.xlu0 %926, %v784
    %v928 = vpop.permute.xlu0 %927
    %930 = vset.pattern.permute.xlu0 6
    %931 = vperm.xlu0 %930, %v789
    %v932 = vpop.permute.xlu0 %931
    %v934 = vlaneseq
    %v935 = vshrl.u32 %v934, 7
    %v936 = vsub.s32 6, %v935
    %v937 = vrot.slane %v694, %v936
    %v938 = vadd.f32 %v928, %v937
    %v939 = vadd.f32 %v932, %v937
    %s940 = sld [smem:[#allocation2 + $0x6]]
    %v941 = vtanh.pop %v938
    %v942 = vtanh.pop %v939
    %v943 = vstv %s940
    %v944 = vmul.f32 %v943, %v941
    %v945 = vmul.f32 %v943, %v942
    %v946 = vadd.f32 %v924, %v944
    %v947 = vadd.f32 %v925, %v945
    %948 = vset.pattern.permute.xlu0 7
    %949 = vperm.xlu0 %948, %v784
    %v950 = vpop.permute.xlu0 %949
    %952 = vset.pattern.permute.xlu0 7
    %953 = vperm.xlu0 %952, %v789
    %v954 = vpop.permute.xlu0 %953
    %v956 = vlaneseq
    %v957 = vshrl.u32 %v956, 7
    %v958 = vsub.s32 7, %v957
    %v959 = vrot.slane %v694, %v958
    %v960 = vadd.f32 %v950, %v959
    %v961 = vadd.f32 %v954, %v959
    %s962 = sld [smem:[#allocation2 + $0x7]]
    %v963 = vtanh.pop %v960
    %v964 = vtanh.pop %v961
    %v965 = vstv %s962
    %v966 = vmul.f32 %v965, %v963
    %v967 = vmul.f32 %v965, %v964
    %v968 = vadd.f32 %v946, %v966
    %v969 = vadd.f32 %v947, %v967
    %970 = vset.pattern.permute.xlu0 8
    %971 = vperm.xlu0 %970, %v784
    %v972 = vpop.permute.xlu0 %971
    %974 = vset.pattern.permute.xlu0 8
    %975 = vperm.xlu0 %974, %v789
    %v976 = vpop.permute.xlu0 %975
    %v978 = vlaneseq
    %v979 = vshrl.u32 %v978, 7
    %v980 = vsub.s32 0, %v979
    %v981 = vrot.slane %v699, %v980
    %v982 = vadd.f32 %v972, %v981
    %v983 = vadd.f32 %v976, %v981
    %s984 = sld [smem:[#allocation2 + $0x8]]
    %v985 = vtanh.pop %v982
    %v986 = vtanh.pop %v983
    %v987 = vstv %s984
    %v988 = vmul.f32 %v987, %v985
    %v989 = vmul.f32 %v987, %v986
    %v990 = vadd.f32 %v968, %v988
    %v991 = vadd.f32 %v969, %v989
    %992 = vset.pattern.permute.xlu0 9
    %993 = vperm.xlu0 %992, %v784
    %v994 = vpop.permute.xlu0 %993
    %996 = vset.pattern.permute.xlu0 9
    %997 = vperm.xlu0 %996, %v789
    %v998 = vpop.permute.xlu0 %997
    %v1000 = vlaneseq
    %v1001 = vshrl.u32 %v1000, 7
    %v1002 = vsub.s32 1, %v1001
    %v1003 = vrot.slane %v699, %v1002
    %v1004 = vadd.f32 %v994, %v1003
    %v1005 = vadd.f32 %v998, %v1003
    %s1006 = sld [smem:[#allocation2 + $0x9]]
    %v1007 = vtanh.pop %v1004
    %v1008 = vtanh.pop %v1005
    %v1009 = vstv %s1006
    %v1010 = vmul.f32 %v1009, %v1007
    %v1011 = vmul.f32 %v1009, %v1008
    %v1012 = vadd.f32 %v990, %v1010
    %v1013 = vadd.f32 %v991, %v1011
    %1014 = vset.pattern.permute.xlu0 10
    %1015 = vperm.xlu0 %1014, %v784
    %v1016 = vpop.permute.xlu0 %1015
    %1018 = vset.pattern.permute.xlu0 10
    %1019 = vperm.xlu0 %1018, %v789
    %v1020 = vpop.permute.xlu0 %1019
    %v1022 = vlaneseq
    %v1023 = vshrl.u32 %v1022, 7
    %v1024 = vsub.s32 2, %v1023
    %v1025 = vrot.slane %v699, %v1024
    %v1026 = vadd.f32 %v1016, %v1025
    %v1027 = vadd.f32 %v1020, %v1025
    %s1028 = sld [smem:[#allocation2 + $0xa]]
    %v1029 = vtanh.pop %v1026
    %v1030 = vtanh.pop %v1027
    %v1031 = vstv %s1028
    %v1032 = vmul.f32 %v1031, %v1029
    %v1033 = vmul.f32 %v1031, %v1030
    %v1034 = vadd.f32 %v1012, %v1032
    %v1035 = vadd.f32 %v1013, %v1033
    %1036 = vset.pattern.permute.xlu0 11
    %1037 = vperm.xlu0 %1036, %v784
    %v1038 = vpop.permute.xlu0 %1037
    %1040 = vset.pattern.permute.xlu0 11
    %1041 = vperm.xlu0 %1040, %v789
    %v1042 = vpop.permute.xlu0 %1041
    %v1044 = vlaneseq
    %v1045 = vshrl.u32 %v1044, 7
    %v1046 = vsub.s32 3, %v1045
    %v1047 = vrot.slane %v699, %v1046
    %v1048 = vadd.f32 %v1038, %v1047
    %v1049 = vadd.f32 %v1042, %v1047
    %s1050 = sld [smem:[#allocation2 + $0xb]]
    %v1051 = vtanh.pop %v1048
    %v1052 = vtanh.pop %v1049
    %v1053 = vstv %s1050
    %v1054 = vmul.f32 %v1053, %v1051
    %v1055 = vmul.f32 %v1053, %v1052
    %v1056 = vadd.f32 %v1034, %v1054
    %v1057 = vadd.f32 %v1035, %v1055
    %v1058 = vsel %vm495, %v1056, -inf
    %1059 = vmax.xlane.f32.xlu0 %v1058
    %v1060 = vpop.xlane.xlu0 %1059
    %v1061 = vsel %vm499, %v1057, -inf
    %1062 = vmax.xlane.f32.xlu0 %v1061
    %v1063 = vpop.xlane.xlu0 %1062
    %v1064 = vsub.f32 %v1056, %v1060
    %v1065 = vsub.f32 %v1057, %v1063
    %v1066 = vmul.f32 %v1064, 1.442695
    %v1067 = vpow.pop %v1066
    %v1068 = vmul.f32 %v1065, 1.442695
    %v1069 = vpow.pop %v1068
    %v1070 = vsel %vm495, %v1067, 0.0
    %1071 = vadd.xlane.f32.xlu0 %v1070
    %v1072 = vpop.xlane.xlu0 %1071
    %v1073 = vsel %vm499, %v1069, 0.0
    %1074 = vadd.xlane.f32.xlu0 %v1073
    %v1075 = vpop.xlane.xlu0 %1074
    %v1076 = vrcp.pop %v1072
    %v1077 = vrcp.pop %v1075
    %v1078 = vmul.f32 %v1072, %v1076
    %v1079 = vmul.f32 %v1075, %v1077
    %v1080 = vsub.f32 2.0, %v1078
    %v1081 = vsub.f32 2.0, %v1079
    %v1082 = vmul.f32 %v1076, %v1080
    %v1083 = vmul.f32 %v1077, %v1081
    %v1084 = vmul.f32 %v1067, %v1082
    %v1085 = vmul.f32 %v1069, %v1083
    %s1086 = scalar_lea.vmem %s2, 8
    %v1087 = vld [vmem:[%s1086] sm:$0xff]
    %v1089 = vsel %vm495, %v1087, 0
    %v1092 = vsel %vm529, %v1085, 0
    %1094 = vmatprep.subr.mxu0 0.0
    %1095 = vmatpush1.msra.mxu0 0.0
    %1096 = vmatprep.subr.mxu0 0.0
    %1097 = vmatpush1.msra.mxu0 0.0
    %1098 = vmatprep.subr.mxu0 0.0
    %1099 = vmatpush1.msra.mxu0 0.0
    %1100 = vmatprep.subr.mxu0 0.0
    %1101 = vmatpush1.msra.mxu0 0.0
    %1102 = vmatprep.subr.mxu0 0.0
    %1103 = vmatpush1.msra.mxu0 0.0
    %1104 = vmatprep.subr.mxu0 0.0
    %1105 = vmatpush1.msra.mxu0 0.0
    %1106 = vmatprep.subr.mxu0 0.0
    %1107 = vmatpush1.msra.mxu0 0.0
    %1108 = vmatprep.subr.mxu0 0.0
    %1109 = vmatpush1.msra.mxu0 0.0
    %1110 = vmatprep.subr.mxu0 0.0
    %1111 = vmatpush1.msra.mxu0 0.0
    %1112 = vmatprep.subr.mxu0 0.0
    %1113 = vmatpush1.msra.mxu0 0.0
    %1114 = vmatprep.subr.mxu0 0.0
    %1115 = vmatpush1.msra.mxu0 0.0
    %1116 = vmatprep.subr.mxu0 0.0
    %1117 = vmatpush1.msra.mxu0 0.0
    %1118 = vmatprep.subr.mxu0 0.0
    %1119 = vmatpush1.msra.mxu0 0.0
    %1120 = vmatprep.subr.mxu0 0.0
    %1121 = vmatpush1.msra.mxu0 0.0
    %1122 = vmatprep.subr.mxu0 0.0
    %1123 = vmatpush1.msra.mxu0 %v1092
    %1124 = vmatprep.subr.mxu0 0.0
    %1125 = vmatpush1.msra.mxu0 %v1084
    %1126 = vmatprep.subr.mxu0 0.0
    %1127 = vmatpush2.msra.mxu0 0.0
    %1128 = vmatprep.subr.mxu0 0.0
    %1129 = vmatpush2.msra.mxu0 0.0
    %1130 = vmatprep.subr.mxu0 0.0
    %1131 = vmatpush2.msra.mxu0 0.0
    %1132 = vmatprep.subr.mxu0 0.0
    %1133 = vmatpush2.msra.mxu0 0.0
    %1134 = vmatprep.subr.mxu0 0.0
    %1135 = vmatpush2.msra.mxu0 0.0
    %1136 = vmatprep.subr.mxu0 0.0
    %1137 = vmatpush2.msra.mxu0 0.0
    %1138 = vmatprep.subr.mxu0 0.0
    %1139 = vmatpush2.msra.mxu0 0.0
    %1140 = vmatprep.subr.mxu0 0.0
    %1141 = vmatpush2.msra.mxu0 0.0
    %1142 = vmatprep.subr.mxu0 0.0
    %1143 = vmatpush2.msra.mxu0 0.0
    %1144 = vmatprep.subr.mxu0 0.0
    %1145 = vmatpush2.msra.mxu0 0.0
    %1146 = vmatprep.subr.mxu0 0.0
    %1147 = vmatpush2.msra.mxu0 0.0
    %1148 = vmatprep.subr.mxu0 0.0
    %1149 = vmatpush2.msra.mxu0 0.0
    %1150 = vmatprep.subr.mxu0 0.0
    %1151 = vmatpush2.msra.mxu0 0.0
    %1152 = vmatprep.subr.mxu0 0.0
    %1153 = vmatpush2.msra.mxu0 0.0
    %1154 = vmatprep.subr.mxu0 0.0
    %1155 = vmatpush2.msra.mxu0 0.0
    %1156 = vmatprep.subr.mxu0 0.0
    %1157 = vmatpush2.msra.mxu0 0.0
    %1158 = vmatprep.mubr.f32.mxu0 0.0
    %1159 = vmatmul.mubr.f32.gmra.mxu0 %v1089
    %v1160 = vpop.f32.mrf.mxu0
    %v1161 = vadd.f32 0.0, %v1160
    %v1162 = vpop.f32.mrf.mxu0
    %1163 = vdwg.mxu0
    %s1164 = scalar_lea.vmem [#allocation5], 8
    %1165 = vst.msk [vmem:[%s1164] sm:$0xff] %vm495, %v1161
    // Predicated region
    $region34: #{tpu_custom_call.1} parent=1 // pred_check
      _
    $region35: #{tpu_custom_call.1} parent=1 // pred_check_branch
      %1167 = sbr.rel (0) target = $region37
    $region36: #{tpu_custom_call.1} parent=1 // pred_region
      %s1169 = ssub.s32 256, 256
      %1170 = vsyncadd [#allocation3], %s1169
      %s1171 = sshll.u32 [#allocation5], 4
      %s1172 = int_to_ptr.vmem [resolvable:$true] %s1171
      %1177 = dma.vmem_to_hbm [thread:$0]  %s1172, 256, %s7, [#allocation3], 128, 128, 8
    $region37: #{tpu_custom_call.1} parent=1 // pred_fallthru
      _
    // Predicated region
    $region38: #{tpu_custom_call.1} parent=1 // pred_check
      _
    $region39: #{tpu_custom_call.1} parent=1 // pred_check_branch
      %1179 = sbr.rel (0) target = $region41
    $region40: #{tpu_custom_call.1} parent=1 // pred_region
      %1180 = dma.done [#allocation3], 256
    $region41: #{tpu_custom_call.1} parent=1 // pred_fallthru
      _
    %1181 = vsyncpa [#allocation3], 1
    %1182 = vsyncpa [#allocation4], 1

</llo_original>
